<compile_context>
chip_gen: v7x
topology: tpu7x:2x2x1
jax: 0.10.0
libtpu: 0.0.40
codegen_flags: <defaults>
</compile_context>

<pallas_src>
import math
import functools

import jax
import jax.numpy as jnp
from jax.experimental import pallas as pl
from jax.experimental.pallas import tpu as pltpu


def attention_org_kernel(x_ref, wqkv_ref, wot_ref, o_ref, w_ref, *,
                         num_heads, compute_dtype):
    # One batch element per grid step.
    x = x_ref[0]                                   # (S, C) f32
    S, C = x.shape
    H = num_heads
    scale = 1.0 / math.sqrt(C)                     # 1 / sqrt(KV_size)
    cdt = compute_dtype

    def mm(a, b):                                  # MXU matmul, f32 accumulation
        return jnp.dot(a.astype(cdt), b.astype(cdt),
                       preferred_element_type=jnp.float32)

    # ---- fused Q/K/V projections for all heads: one (3HC, C) @ (C, S) ------
    xT = x.T                                       # (C, S)  — single transpose
    qkvT = mm(wqkv_ref[...], xT)                   # (3*H*C, S) f32
    qkvT = qkvT.reshape(3 * H, C, S)               # sublane-aligned split (C % 8 == 0)
    qT = qkvT[0:H]                                 # (H, C, S)  == Q^T per head
    kT = qkvT[H:2 * H]                             # (H, C, S)  == K^T per head
    vT = qkvT[2 * H:3 * H]                         # (H, C, S)  == V^T per head

    # ---- attention scores: Q^T @ K  -> (H, C, C), no per-head transposes ---
    scores = jnp.einsum('hcs,hds->hcd', qT.astype(cdt), kT.astype(cdt),
                        preferred_element_type=jnp.float32) * scale

    # ---- psi = InstanceNorm2d(num_heads): per-(batch, head) stats over the
    #      CxC map, affine=False, eps=1e-5, biased variance.  One-pass stats.
    inv_n = 1.0 / float(C * C)
    s1 = jnp.sum(jnp.sum(scores, axis=-1, keepdims=True),
                 axis=-2, keepdims=True) * inv_n                     # (H,1,1) mean
    s2 = jnp.sum(jnp.sum(scores * scores, axis=-1, keepdims=True),
                 axis=-2, keepdims=True) * inv_n                     # (H,1,1) E[x^2]
    var = s2 - s1 * s1
    sn = (scores - s1) * jax.lax.rsqrt(var + 1e-5)

    # ---- softmax over last dim (dim=3 of the PyTorch (B,H,C,C) tensor) -----
    sn = sn - jnp.max(sn, axis=-1, keepdims=True)
    e = jnp.exp(sn)
    probs = e * pl.reciprocal(jnp.sum(e, axis=-1, keepdims=True), approx=True)

    # weights = attention_probs1.mean(dim=1)   (vis=True)
    w_ref[0] = jnp.mean(probs, axis=0)                               # (C, C)

    # attn_dropout: identity (eval mode).
    # ---- context = probs @ V^T, accumulated in transposed (C, S) layout ----
    ctxT = jnp.einsum('hcd,hds->hcs', probs.astype(cdt), vT.astype(cdt),
                      preferred_element_type=jnp.float32)            # (H, C, S)
    ctx = jnp.mean(ctxT, axis=0).T                                   # (S, C) — one transpose

    # ---- out1 (no bias); weight pre-transposed to (in, out) host-side ------
    o_ref[0] = mm(ctx, wot_ref[...])                                 # (S, C)
    # proj_dropout: identity (eval mode).


def attention_org(emb1, wq, wk, wv, wo, *, num_heads,
                  compute_dtype=jnp.float32):
    """Attention_org.forward.  Returns (O1, weights) with vis=True semantics.

    emb1: (B, S, C) f32
    wq/wk/wv: (H, C, C) PyTorch nn.Linear weights (out, in), one per head
    wo:       (C, C)   out1 weight (out, in)
    For v6e/v7x pass compute_dtype=jnp.bfloat16 (stats stay in f32).
    """
    B, S, C = emb1.shape
    H = num_heads

    # Host-side weight prep (free): stack heads + pre-transpose out1.
    w_qkv = jnp.concatenate([wq.reshape(H * C, C),
                             wk.reshape(H * C, C),
                             wv.reshape(H * C, C)], axis=0)          # (3HC, C)
    wo_t = wo.T                                                      # (C, C) as (in, out)

    kernel = functools.partial(attention_org_kernel,
                               num_heads=H, compute_dtype=compute_dtype)

    grid_spec = pltpu.PrefetchScalarGridSpec(
        num_scalar_prefetch=0,
        grid=(B,),
        in_specs=[
            pl.BlockSpec((1, S, C), lambda b: (b, 0, 0)),            # emb1 per batch
            pl.BlockSpec((3 * H * C, C), lambda b: (0, 0)),          # fused Wq/Wk/Wv
            pl.BlockSpec((C, C), lambda b: (0, 0)),                  # Wo^T
        ],
        out_specs=[
            pl.BlockSpec((1, S, C), lambda b: (b, 0, 0)),            # O1
            pl.BlockSpec((1, C, C), lambda b: (b, 0, 0)),            # weights (vis)
        ],
    )
    out_shapes = (jax.ShapeDtypeStruct((B, S, C), jnp.float32),
                  jax.ShapeDtypeStruct((B, C, C), jnp.float32))

    return pl.pallas_call(
        kernel,
        grid_spec=grid_spec,
        out_shape=out_shapes,
        compiler_params=pltpu.CompilerParams(
            dimension_semantics=("parallel",),
            vmem_limit_bytes=64 * 1024 * 1024,
        ),
    )(emb1, w_qkv, wo_t)


def reference(x, wq, wk, wv, wo):
    """Pure-JAX reference of Attention_org forward (eval mode, vis=True)."""
    B, S, C = x.shape
    hp = jax.lax.Precision.HIGHEST
    q = jnp.einsum('bsc,hdc->bhsd', x, wq, precision=hp)
    k = jnp.einsum('bsc,hdc->bhsd', x, wk, precision=hp)
    v = jnp.einsum('bsc,hdc->bhsd', x, wv, precision=hp)
    scores = jnp.einsum('bhsc,bhsd->bhcd', q, k, precision=hp) / math.sqrt(C)
    m = jnp.mean(scores, (-1, -2), keepdims=True)
    var = jnp.mean((scores - m) ** 2, (-1, -2), keepdims=True)
    sn = (scores - m) / jnp.sqrt(var + 1e-5)
    probs = jax.nn.softmax(sn, axis=-1)
    weights = probs.mean(1)                                          # (B, C, C)
    ctx = jnp.einsum('bhcd,bhsd->bhcs', probs, v, precision=hp)      # probs @ V^T
    ctx = jnp.transpose(ctx, (0, 3, 2, 1)).mean(-1)                  # (B, S, C)
    o1 = jnp.einsum('bsc,dc->bsd', ctx, wo, precision=hp)
    return o1, weights


if __name__ == "__main__":
    B, S, C, H = 2, 16, 32, 4
    key = jax.random.PRNGKey(0)
    k0, k1, k2, k3, kx = jax.random.split(key, 5)

    wq = 0.1 * jax.random.normal(k0, (H, C, C), jnp.float32)
    wk = 0.1 * jax.random.normal(k1, (H, C, C), jnp.float32)
    wv = 0.1 * jax.random.normal(k2, (H, C, C), jnp.float32)
    wo = 0.1 * jax.random.normal(k3, (C, C), jnp.float32)
    emb1 = jax.random.normal(kx, (B, S, C), jnp.float32)

    o1, wts = attention_org(emb1, wq, wk, wv, wo, num_heads=H)
    o1 = jax.block_until_ready(o1)
    wts = jax.block_until_ready(wts)

    ref_o1, ref_w = reference(emb1, wq, wk, wv, wo)
    assert o1.shape == (B, S, C) and wts.shape == (B, C, C)
    assert jnp.allclose(o1, ref_o1, rtol=2e-3, atol=2e-3), \
        float(jnp.max(jnp.abs(o1 - ref_o1)))
    assert jnp.allclose(wts, ref_w, rtol=2e-3, atol=2e-3), \
        float(jnp.max(jnp.abs(wts - ref_w)))

    print("KERNEL_OK")
</pallas_src>

<mosaic_0001>
module attributes {stable_mosaic.version = 11 : i64} {
  func.func @attention_org_kernel(%arg0: i32, %arg1: memref<1x16x32xf32, #tpu.memory_space<vmem>>, %arg2: memref<384x32xf32, #tpu.memory_space<vmem>>, %arg3: memref<32x32xf32, #tpu.memory_space<vmem>>, %arg4: memref<1x16x32xf32, #tpu.memory_space<vmem>>, %arg5: memref<1x32x32xf32, #tpu.memory_space<vmem>>) attributes {dimension_semantics = [#tpu.dimension_semantics<parallel>], iteration_bounds = array<i64: 2>, scalar_prefetch = 0 : i64, scratch_operands = 0 : i64, tpu.core_type = #tpu.core_type<tc>, window_params = [{transform_indices = @transform_0, window_bounds = array<i64: 1, 16, 32>}, {pipeline_mode = #tpu.pipeline_mode<synchronous>, transform_indices = @transform_1, window_bounds = array<i64: 384, 32>}, {pipeline_mode = #tpu.pipeline_mode<synchronous>, transform_indices = @transform_2, window_bounds = array<i64: 32, 32>}, {transform_indices = @transform_3, window_bounds = array<i64: 1, 16, 32>}, {transform_indices = @transform_4, window_bounds = array<i64: 1, 32, 32>}]} {
    %c0 = arith.constant 0 : index
    %c0_0 = arith.constant 0 : index
    %c0_1 = arith.constant 0 : index
    %0 = vector.load %arg1[%c0, %c0_0, %c0_1] : memref<1x16x32xf32, #tpu.memory_space<vmem>>, vector<1x16x32xf32>
    %1 = vector.shape_cast %0 : vector<1x16x32xf32> to vector<16x32xf32>
    %2 = tpu.transpose %1, [1, 0] : vector<16x32xf32> -> vector<32x16xf32>
    %c0_2 = arith.constant 0 : index
    %c0_3 = arith.constant 0 : index
    %3 = vector.load %arg2[%c0_2, %c0_3] : memref<384x32xf32, #tpu.memory_space<vmem>>, vector<384x32xf32>
    %cst = arith.constant dense<0.000000e+00> : vector<384x16xf32>
    %4 = tpu.matmul %3, %2, %cst {dimension_numbers = #tpu.dot_dimension_numbers<[1], [0], [0], [1], [0, 0, 1, 1], [], []>} : vector<384x32xf32>, vector<32x16xf32>, vector<384x16xf32> -> vector<384x16xf32>
    %5 = vector.shape_cast %4 : vector<384x16xf32> to vector<12x32x16xf32>
    %6 = vector.extract_strided_slice %5 {offsets = [0, 0, 0], sizes = [4, 32, 16], strides = [1, 1, 1]} : vector<12x32x16xf32> to vector<4x32x16xf32>
    %7 = vector.extract_strided_slice %5 {offsets = [4, 0, 0], sizes = [4, 32, 16], strides = [1, 1, 1]} : vector<12x32x16xf32> to vector<4x32x16xf32>
    %8 = vector.extract_strided_slice %5 {offsets = [8, 0, 0], sizes = [4, 32, 16], strides = [1, 1, 1]} : vector<12x32x16xf32> to vector<4x32x16xf32>
    "tpu.trace_start"() <{level = 10 : i32, message = "hcs,hds->hcd"}> : () -> ()
    %cst_4 = arith.constant dense<0.000000e+00> : vector<4x32x32xf32>
    %9 = tpu.matmul %6, %7, %cst_4 {dimension_numbers = #tpu.dot_dimension_numbers<[2], [2], [1], [1], [0, 0, 0, 1, 1, 1], [0], [0]>} : vector<4x32x16xf32>, vector<4x32x16xf32>, vector<4x32x32xf32> -> vector<4x32x32xf32>
    "tpu.trace_stop"() : () -> ()
    %cst_5 = arith.constant 0.176776692 : f32
    %10 = vector.broadcast %cst_5 : f32 to vector<4x32x32xf32>
    %11 = arith.mulf %9, %10 : vector<4x32x32xf32>
    %cst_6 = arith.constant dense<0.000000e+00> : vector<4x32xf32>
    %12 = vector.multi_reduction <add>, %11, %cst_6 [2] : vector<4x32x32xf32> to vector<4x32xf32>
    %13 = vector.shape_cast %12 : vector<4x32xf32> to vector<4x32x1xf32>
    %cst_7 = arith.constant dense<0.000000e+00> : vector<4x1xf32>
    %14 = vector.multi_reduction <add>, %13, %cst_7 [1] : vector<4x32x1xf32> to vector<4x1xf32>
    %15 = vector.shape_cast %14 : vector<4x1xf32> to vector<4x1x1xf32>
    %cst_8 = arith.constant 9.765625E-4 : f32
    %16 = vector.broadcast %cst_8 : f32 to vector<4x1x1xf32>
    %17 = arith.mulf %15, %16 : vector<4x1x1xf32>
    %18 = arith.mulf %11, %11 : vector<4x32x32xf32>
    %cst_9 = arith.constant dense<0.000000e+00> : vector<4x32xf32>
    %19 = vector.multi_reduction <add>, %18, %cst_9 [2] : vector<4x32x32xf32> to vector<4x32xf32>
    %20 = vector.shape_cast %19 : vector<4x32xf32> to vector<4x32x1xf32>
    %cst_10 = arith.constant dense<0.000000e+00> : vector<4x1xf32>
    %21 = vector.multi_reduction <add>, %20, %cst_10 [1] : vector<4x32x1xf32> to vector<4x1xf32>
    %22 = vector.shape_cast %21 : vector<4x1xf32> to vector<4x1x1xf32>
    %cst_11 = arith.constant 9.765625E-4 : f32
    %23 = vector.broadcast %cst_11 : f32 to vector<4x1x1xf32>
    %24 = arith.mulf %22, %23 : vector<4x1x1xf32>
    %25 = arith.mulf %17, %17 : vector<4x1x1xf32>
    %26 = arith.subf %24, %25 : vector<4x1x1xf32>
    %27 = vector.broadcast %17 : vector<4x1x1xf32> to vector<4x32x32xf32>
    %28 = arith.subf %11, %27 : vector<4x32x32xf32>
    %cst_12 = arith.constant 9.99999974E-6 : f32
    %29 = vector.broadcast %cst_12 : f32 to vector<4x1x1xf32>
    %30 = arith.addf %26, %29 : vector<4x1x1xf32>
    %31 = math.rsqrt %30 : vector<4x1x1xf32>
    %32 = vector.broadcast %31 : vector<4x1x1xf32> to vector<4x32x32xf32>
    %33 = arith.mulf %28, %32 : vector<4x32x32xf32>
    %cst_13 = arith.constant dense<0xFF800000> : vector<4x32xf32>
    %34 = vector.multi_reduction <maximumf>, %33, %cst_13 [2] : vector<4x32x32xf32> to vector<4x32xf32>
    %35 = vector.shape_cast %34 : vector<4x32xf32> to vector<4x32x1xf32>
    %36 = vector.broadcast %35 : vector<4x32x1xf32> to vector<4x32x32xf32>
    %37 = arith.subf %33, %36 : vector<4x32x32xf32>
    %38 = math.exp %37 : vector<4x32x32xf32>
    %cst_14 = arith.constant dense<0.000000e+00> : vector<4x32xf32>
    %39 = vector.multi_reduction <add>, %38, %cst_14 [2] : vector<4x32x32xf32> to vector<4x32xf32>
    %40 = vector.shape_cast %39 : vector<4x32xf32> to vector<4x32x1xf32>
    %41 = tpu.reciprocal %40 {approx = true} : vector<4x32x1xf32> -> vector<4x32x1xf32>
    %42 = vector.broadcast %41 : vector<4x32x1xf32> to vector<4x32x32xf32>
    %43 = arith.mulf %38, %42 : vector<4x32x32xf32>
    %cst_15 = arith.constant dense<0.000000e+00> : vector<32x32xf32>
    %44 = vector.multi_reduction <add>, %43, %cst_15 [0] : vector<4x32x32xf32> to vector<32x32xf32>
    %cst_16 = arith.constant 4.000000e+00 : f32
    %45 = vector.broadcast %cst_16 : f32 to vector<32x32xf32>
    %46 = arith.divf %44, %45 : vector<32x32xf32>
    %c0_17 = arith.constant 0 : index
    %c0_18 = arith.constant 0 : index
    %c0_19 = arith.constant 0 : index
    %47 = vector.load %arg5[%c0_17, %c0_18, %c0_19] : memref<1x32x32xf32, #tpu.memory_space<vmem>>, vector<1x32x32xf32>
    %48 = vector.shape_cast %47 : vector<1x32x32xf32> to vector<32x32xf32>
    %49 = vector.shape_cast %46 : vector<32x32xf32> to vector<1x32x32xf32>
    tpu.vector_store %arg5[%c0_17, %c0_18, %c0_19], %49 {strides = array<i32>} : memref<1x32x32xf32, #tpu.memory_space<vmem>>, vector<1x32x32xf32>,
    "tpu.trace_start"() <{level = 10 : i32, message = "hcd,hds->hcs"}> : () -> ()
    %cst_20 = arith.constant dense<0.000000e+00> : vector<4x32x16xf32>
    %50 = tpu.matmul %43, %8, %cst_20 {dimension_numbers = #tpu.dot_dimension_numbers<[2], [1], [1], [2], [0, 0, 0, 1, 1, 2], [0], [0]>} : vector<4x32x32xf32>, vector<4x32x16xf32>, vector<4x32x16xf32> -> vector<4x32x16xf32>
    "tpu.trace_stop"() : () -> ()
    %cst_21 = arith.constant dense<0.000000e+00> : vector<32x16xf32>
    %51 = vector.multi_reduction <add>, %50, %cst_21 [0] : vector<4x32x16xf32> to vector<32x16xf32>
    %cst_22 = arith.constant 4.000000e+00 : f32
    %52 = vector.broadcast %cst_22 : f32 to vector<32x16xf32>
    %53 = arith.divf %51, %52 : vector<32x16xf32>
    %54 = tpu.transpose %53, [1, 0] : vector<32x16xf32> -> vector<16x32xf32>
    %c0_23 = arith.constant 0 : index
    %c0_24 = arith.constant 0 : index
    %55 = vector.load %arg3[%c0_23, %c0_24] : memref<32x32xf32, #tpu.memory_space<vmem>>, vector<32x32xf32>
    %cst_25 = arith.constant dense<0.000000e+00> : vector<16x32xf32>
    %56 = tpu.matmul %54, %55, %cst_25 {dimension_numbers = #tpu.dot_dimension_numbers<[1], [0], [0], [1], [0, 0, 1, 1], [], []>} : vector<16x32xf32>, vector<32x32xf32>, vector<16x32xf32> -> vector<16x32xf32>
    %c0_26 = arith.constant 0 : index
    %c0_27 = arith.constant 0 : index
    %c0_28 = arith.constant 0 : index
    %57 = vector.load %arg4[%c0_26, %c0_27, %c0_28] : memref<1x16x32xf32, #tpu.memory_space<vmem>>, vector<1x16x32xf32>
    %58 = vector.shape_cast %57 : vector<1x16x32xf32> to vector<16x32xf32>
    %59 = vector.shape_cast %56 : vector<16x32xf32> to vector<1x16x32xf32>
    tpu.vector_store %arg4[%c0_26, %c0_27, %c0_28], %59 {strides = array<i32>} : memref<1x16x32xf32, #tpu.memory_space<vmem>>, vector<1x16x32xf32>,
    return
  }
  func.func @transform_0(%arg0: i32) -> (i32, i32, i32) {
    %c0_i32 = arith.constant 0 : i32
    %c0_i32_0 = arith.constant 0 : i32
    %c0_i32_1 = arith.constant 0 : i32
    return %arg0, %c0_i32, %c0_i32_0 : i32, i32, i32
  }
  func.func @transform_1(%arg0: i32) -> (i32, i32) {
    %c0_i32 = arith.constant 0 : i32
    %c0_i32_0 = arith.constant 0 : i32
    %c0_i32_1 = arith.constant 0 : i32
    return %c0_i32, %c0_i32_0 : i32, i32
  }
  func.func @transform_2(%arg0: i32) -> (i32, i32) {
    %c0_i32 = arith.constant 0 : i32
    %c0_i32_0 = arith.constant 0 : i32
    %c0_i32_1 = arith.constant 0 : i32
    return %c0_i32, %c0_i32_0 : i32, i32
  }
  func.func @transform_3(%arg0: i32) -> (i32, i32, i32) {
    %c0_i32 = arith.constant 0 : i32
    %c0_i32_0 = arith.constant 0 : i32
    %c0_i32_1 = arith.constant 0 : i32
    return %arg0, %c0_i32, %c0_i32_0 : i32, i32, i32
  }
  func.func @transform_4(%arg0: i32) -> (i32, i32, i32) {
    %c0_i32 = arith.constant 0 : i32
    %c0_i32_0 = arith.constant 0 : i32
    %c0_i32_1 = arith.constant 0 : i32
    return %arg0, %c0_i32, %c0_i32_0 : i32, i32, i32
  }
}

</mosaic_0001>

<llo_original>
// kernel: tpu_custom_call.1
$region0: #{tpu_custom_call.1}
  #allocation0 [shape = 'u32[]', space=smem, size = 0x4, offset = 0x4, fixed_abs, tag = 'smem constant byte address 0x4 - core index']
  #allocation1 [shape = 'u32[144,128]{1,0:T(1,128)}', space=vmem, size = 0x12000, scoped, tag = 'internal scratch']
  %s0 = inlined_call_operand.hbm [shape: f32[2,16,32], index: 0, kind: input, shape index: {}]
  %s1 = inlined_call_operand.hbm [shape: f32[384,32], index: 1, kind: input, shape index: {}]
  %s2 = inlined_call_operand.hbm [shape: f32[32,32], index: 2, kind: input, shape index: {}]
  %s3 = inlined_call_operand.hbm [shape: f32[2,16,32], index: 3, kind: output, shape index: {0}]
  %s4 = inlined_call_operand.hbm [shape: f32[2,32,32], index: 4, kind: output, shape index: {1}]
  %5 = xla_tuple %s3, %s4
  %s6 = sld [smem:[#allocation0]]
  $region65: #{tpu_custom_call.1} parent=0
    _
  %s8 = ssub.s32 1, %s6
  %s9 = scalar_select 0, %s8, %s6
  $region1: #{tpu_custom_call.1} parent=0
    #allocation2 [shape = 'u8[16384]{0}', space=vmem, size = 0x4000, scoped, tag = 'input window, operand 0']
    #allocation3 [shape = 's32[2]{0}', space=sflag, size = 0x8, scoped, tag = 'scoped memory for tpu_custom_call.1']
    #allocation4 [shape = 's32[2]{0}', space=sflag, size = 0x8, scoped, tag = 'scoped memory for tpu_custom_call.1']
    #allocation5 [shape = 'u8[196608]{0}', space=vmem, size = 0x30000, scoped, tag = 'input window, operand 1, single buffered']
    #allocation6 [shape = 's32[1]{0}', space=sflag, size = 0x4, scoped, tag = 'scoped memory for tpu_custom_call.1']
    #allocation7 [shape = 'u8[16384]{0}', space=vmem, size = 0x4000, scoped, tag = 'input window, operand 2, single buffered']
    #allocation8 [shape = 'u8[16384]{0}', space=vmem, size = 0x4000, scoped, tag = 'output window, operand 0']
    #allocation9 [shape = 'u8[32768]{0}', space=vmem, size = 0x8000, scoped, tag = 'output window, operand 1']
    #allocation10 [shape = 's32[2]{0}', space=sflag, size = 0x8, scoped, tag = 'scoped memory for tpu_custom_call.1']
    %10 = vsyncpa [#allocation3], 0
    %s11 = scalar_lea.sflag [#allocation3], 1
    %12 = vsyncpa %s11, 0
    %13 = vsyncpa [#allocation6], 0
    %14 = vsyncpa [#allocation4], 0
    %s15 = scalar_lea.sflag [#allocation4], 1
    %16 = vsyncpa %s15, 0
    %17 = vsyncpa [#allocation10], 0
    %s18 = scalar_lea.sflag [#allocation10], 1
    %19 = vsyncpa %s18, 0
    loop: start=0, step=1, limit=4
    $region2: #{tpu_custom_call.1} parent=1 // loop_pre_header
      _
    $region3: #{tpu_custom_call.1} parent=1 // loop_header
      %s21 = sphi 0, %s25
      %p22 = scmp.ge.s32.totalorder %s21, 4
      %s31 = sphi 0, %s33
      %s34 = sphi 0, %s31
      %s35 = sphi 0, %s34
      %s51 = sphi 0, %s35
      %s55 = sphi 0, %s55
      %s57 = sphi 0, %s55
      %s58 = sphi 0, %s57
      %s72 = sphi 0, %s58
      %s76 = sphi 0, %s76
      %s78 = sphi 0, %s76
      %s79 = sphi 0, %s78
      %s93 = sphi 0, %s79
      %s99 = sphi 0, %s101
      %s102 = sphi 0, %s99
      %s103 = sphi 0, %s102
      %s119 = sphi 0, %s103
      %s125 = sphi 0, %s127
      %s128 = sphi 0, %s125
      %s129 = sphi 0, %s128
      %s145 = sphi 0, %s129
    $region4: #{tpu_custom_call.1} parent=1 // loop_header_branch
      %24 = sbr.rel (%p22) target = $region8
    $region5: #{tpu_custom_call.1} parent=1 // loop_body
      %s26 = ssub.s32 %s21, 1
      %s27 = ssub.s32 %s21, 2
      %s28 = sadd.s32 %s21, 1
      %s29 = ssub.s32 %s21, %s28
      %p30 = scmp.eq.s32.totalorder %s29, 0
      %s32 = sadd.s32 %s31, 1
      %s33 = scalar_select %p30, %s31, %s32
      %p36 = pneg %p30
      %p37 = scmp.eq.s32.totalorder %s21, 1
      %p38 = por %p36, %p37
      %p39 = scmp.ne.s32.totalorder %s31, %s34
      %p40 = scmp.eq.s32.totalorder %s21, 0
      %p41 = por %p39, %p40
      %p42 = scmp.ne.s32.totalorder %s31, %s34
      %p43 = scmp.eq.s32.totalorder %s26, 1
      %p44 = por %p42, %p43
      %p45 = scmp.ne.s32.totalorder %s34, %s35
      %p46 = scmp.eq.s32.totalorder %s26, 0
      %p47 = por %p45, %p46
      %p48 = scmp.ne.s32.totalorder %s34, %s35
      %p49 = scmp.eq.s32.totalorder %s27, 1
      %p50 = por %p48, %p49
      %p52 = scmp.ne.s32.totalorder %s35, %s51
      %p53 = scmp.eq.s32.totalorder %s27, 0
      %p54 = por %p52, %p53
      %s56 = sadd.s32 %s55, 1
      %p59 = scmp.eq.s32.totalorder %s21, 1
      %p60 = scmp.ne.s32.totalorder %s55, %s57
      %p61 = scmp.eq.s32.totalorder %s21, 0
      %p62 = por %p60, %p61
      %p63 = scmp.ne.s32.totalorder %s55, %s57
      %p64 = scmp.eq.s32.totalorder %s26, 1
      %p65 = por %p63, %p64
      %p66 = scmp.ne.s32.totalorder %s57, %s58
      %p67 = scmp.eq.s32.totalorder %s26, 0
      %p68 = por %p66, %p67
      %p69 = scmp.ne.s32.totalorder %s57, %s58
      %p70 = scmp.eq.s32.totalorder %s27, 1
      %p71 = por %p69, %p70
      %p73 = scmp.ne.s32.totalorder %s58, %s72
      %p74 = scmp.eq.s32.totalorder %s27, 0
      %p75 = por %p73, %p74
      %s77 = sadd.s32 %s76, 1
      %p80 = scmp.eq.s32.totalorder %s21, 1
      %p81 = scmp.ne.s32.totalorder %s76, %s78
      %p82 = scmp.eq.s32.totalorder %s21, 0
      %p83 = por %p81, %p82
      %p84 = scmp.ne.s32.totalorder %s76, %s78
      %p85 = scmp.eq.s32.totalorder %s26, 1
      %p86 = por %p84, %p85
      %p87 = scmp.ne.s32.totalorder %s78, %s79
      %p88 = scmp.eq.s32.totalorder %s26, 0
      %p89 = por %p87, %p88
      %p90 = scmp.ne.s32.totalorder %s78, %s79
      %p91 = scmp.eq.s32.totalorder %s27, 1
      %p92 = por %p90, %p91
      %p94 = scmp.ne.s32.totalorder %s79, %s93
      %p95 = scmp.eq.s32.totalorder %s27, 0
      %p96 = por %p94, %p95
      %s97 = ssub.s32 %s21, %s28
      %p98 = scmp.eq.s32.totalorder %s97, 0
      %s100 = sadd.s32 %s99, 1
      %s101 = scalar_select %p98, %s99, %s100
      %p104 = pneg %p98
      %p105 = scmp.eq.s32.totalorder %s21, 1
      %p106 = por %p104, %p105
      %p107 = scmp.ne.s32.totalorder %s99, %s102
      %p108 = scmp.eq.s32.totalorder %s21, 0
      %p109 = por %p107, %p108
      %p110 = scmp.ne.s32.totalorder %s99, %s102
      %p111 = scmp.eq.s32.totalorder %s26, 1
      %p112 = por %p110, %p111
      %p113 = scmp.ne.s32.totalorder %s102, %s103
      %p114 = scmp.eq.s32.totalorder %s26, 0
      %p115 = por %p113, %p114
      %p116 = scmp.ne.s32.totalorder %s102, %s103
      %p117 = scmp.eq.s32.totalorder %s27, 1
      %p118 = por %p116, %p117
      %p120 = scmp.ne.s32.totalorder %s103, %s119
      %p121 = scmp.eq.s32.totalorder %s27, 0
      %p122 = por %p120, %p121
      %s123 = ssub.s32 %s21, %s28
      %p124 = scmp.eq.s32.totalorder %s123, 0
      %s126 = sadd.s32 %s125, 1
      %s127 = scalar_select %p124, %s125, %s126
      %p130 = pneg %p124
      %p131 = scmp.eq.s32.totalorder %s21, 1
      %p132 = por %p130, %p131
      %p133 = scmp.ne.s32.totalorder %s125, %s128
      %p134 = scmp.eq.s32.totalorder %s21, 0
      %p135 = por %p133, %p134
      %p136 = scmp.ne.s32.totalorder %s125, %s128
      %p137 = scmp.eq.s32.totalorder %s26, 1
      %p138 = por %p136, %p137
      %p139 = scmp.ne.s32.totalorder %s128, %s129
      %p140 = scmp.eq.s32.totalorder %s26, 0
      %p141 = por %p139, %p140
      %p142 = scmp.ne.s32.totalorder %s128, %s129
      %p143 = scmp.eq.s32.totalorder %s27, 1
      %p144 = por %p142, %p143
      %p146 = scmp.ne.s32.totalorder %s129, %s145
      %p147 = scmp.eq.s32.totalorder %s27, 0
      %p148 = por %p146, %p147
      %p149 = scmp.le.s32.totalorder 1, %s21
      %p150 = scmp.lt.s32.totalorder %s21, 3
      %p151 = pnand %p149, %p150
      %p152 = pneg %p151
      // Predicated region
      $region9: #{tpu_custom_call.1} parent=5 // pred_check
        _
      $region10: #{tpu_custom_call.1} parent=5 // pred_check_branch
        %154 = sbr.rel (%p151) target = $region12
      $region11: #{tpu_custom_call.1} parent=5 // pred_region
        %s155 = ssub.s32 %s21, 1
        // Predicated region
        $region13: #{tpu_custom_call.1} parent=11 // pred_check
          %p156 = pneg %p68
        $region14: #{tpu_custom_call.1} parent=11 // pred_check_branch
          %158 = sbr.rel (%p156) target = $region16
        $region15: #{tpu_custom_call.1} parent=11 // pred_region
          %s160 = ssub.s32 6144, 6144
          %161 = vsyncadd [#allocation6], %s160
          %s162 = sshll.u32 [#allocation5], 4
          %s163 = int_to_ptr.vmem [resolvable:$true] %s162
          %168 = dma.hbm_to_vmem [thread:$0]  %s1, 6144, %s163, [#allocation6], 128, 128, 8
        $region16: #{tpu_custom_call.1} parent=11 // pred_fallthru
          _
        // Predicated region
        $region17: #{tpu_custom_call.1} parent=11 // pred_check
          %p169 = pneg %p89
        $region18: #{tpu_custom_call.1} parent=11 // pred_check_branch
          %171 = sbr.rel (%p169) target = $region20
        $region19: #{tpu_custom_call.1} parent=11 // pred_region
          %s173 = ssub.s32 512, 512
          %174 = vsyncadd [#allocation6], %s173
          %s175 = sshll.u32 [#allocation7], 4
          %s176 = int_to_ptr.vmem [resolvable:$true] %s175
          %181 = dma.hbm_to_vmem [thread:$0]  %s2, 512, %s176, [#allocation6], 128, 128, 8
        $region20: #{tpu_custom_call.1} parent=11 // pred_fallthru
          _
      $region12: #{tpu_custom_call.1} parent=5 // pred_fallthru
        _
      %p182 = scmp.lt.s32.totalorder %s21, 2
      // Predicated region
      $region21: #{tpu_custom_call.1} parent=5 // pred_check
        %p183 = pneg %p182
      $region22: #{tpu_custom_call.1} parent=5 // pred_check_branch
        %185 = sbr.rel (%p183) target = $region24
      $region23: #{tpu_custom_call.1} parent=5 // pred_region
        // Predicated region
        $region25: #{tpu_custom_call.1} parent=23 // pred_check
          %p186 = pneg %p41
        $region26: #{tpu_custom_call.1} parent=23 // pred_check_branch
          %188 = sbr.rel (%p186) target = $region28
        $region27: #{tpu_custom_call.1} parent=23 // pred_region
          %s189 = sand.u32 %s31, 1
          %s190 = scalar_lea.sflag [#allocation3], %s189
          %s191 = sand.u32 %s31, 1
          %s192 = smul.addr %s191, 16
          %s193 = scalar_lea.vmem [#allocation2], %s192
          %s195 = ssub.s32 256, 256
          %196 = vsyncadd %s190, %s195
          %s197 = smul.addr %s21, 2
          %s198 = smul.addr %s197, 128
          %s199 = scalar_lea.hbm %s0, %s198
          %s200 = sshll.u32 %s193, 4
          %s201 = int_to_ptr.vmem [resolvable:$true] %s200
          %206 = dma.hbm_to_vmem [thread:$0]  %s199, 256, %s201, %s190, 128, 128, 8
        $region28: #{tpu_custom_call.1} parent=23 // pred_fallthru
          _
      $region24: #{tpu_custom_call.1} parent=5 // pred_fallthru
        _
      %p207 = scmp.le.s32.totalorder 1, %s21
      %p208 = scmp.lt.s32.totalorder %s21, 3
      %p209 = pnand %p207, %p208
      %p210 = pneg %p209
      // Predicated region
      $region29: #{tpu_custom_call.1} parent=5 // pred_check
        _
      $region30: #{tpu_custom_call.1} parent=5 // pred_check_branch
        %212 = sbr.rel (%p209) target = $region32
      $region31: #{tpu_custom_call.1} parent=5 // pred_region
        %s213 = ssub.s32 %s21, 1
        %s214 = sand.u32 %s34, 1
        %s215 = scalar_lea.sflag [#allocation3], %s214
        %s216 = sand.u32 %s34, 1
        %s217 = smul.addr %s216, 16
        %s218 = scalar_lea.vmem [#allocation2], %s217
        // Predicated region
        $region33: #{tpu_custom_call.1} parent=31 // pred_check
          %p219 = pneg %p47
        $region34: #{tpu_custom_call.1} parent=31 // pred_check_branch
          %221 = sbr.rel (%p219) target = $region36
        $region35: #{tpu_custom_call.1} parent=31 // pred_region
          %222 = dma.done %s215, 256
        $region36: #{tpu_custom_call.1} parent=31 // pred_fallthru
          _
        // Predicated region
        $region37: #{tpu_custom_call.1} parent=31 // pred_check
          %p223 = pneg %p68
        $region38: #{tpu_custom_call.1} parent=31 // pred_check_branch
          %225 = sbr.rel (%p223) target = $region40
        $region39: #{tpu_custom_call.1} parent=31 // pred_region
          %226 = dma.done [#allocation6], 6144
        $region40: #{tpu_custom_call.1} parent=31 // pred_fallthru
          _
        // Predicated region
        $region41: #{tpu_custom_call.1} parent=31 // pred_check
          %p227 = pneg %p89
        $region42: #{tpu_custom_call.1} parent=31 // pred_check_branch
          %229 = sbr.rel (%p227) target = $region44
        $region43: #{tpu_custom_call.1} parent=31 // pred_region
          %230 = dma.done [#allocation6], 512
        $region44: #{tpu_custom_call.1} parent=31 // pred_fallthru
          _
        %s231 = sand.u32 %s34, 1
        %s232 = scalar_lea.sflag [#allocation3], %s231
        %s233 = sand.u32 %s34, 1
        %s234 = smul.addr %s233, 16
        %s235 = scalar_lea.vmem [#allocation2], %s234
        %p236 = pneg %p47
        %p237 = pneg %p44
        %p238 = pneg %p68
        %p239 = pneg %p65
        %p240 = pneg %p89
        %p241 = pneg %p86
        %p242 = pneg %p115
        %p243 = pneg %p112
        %s244 = sand.u32 %s102, 1
        %s245 = scalar_lea.sflag [#allocation4], %s244
        %s246 = sand.u32 %s102, 1
        %s247 = smul.addr %s246, 16
        %s248 = scalar_lea.vmem [#allocation8], %s247
        %p249 = pneg %p141
        %p250 = pneg %p138
        %s251 = sand.u32 %s128, 1
        %s252 = scalar_lea.sflag [#allocation10], %s251
        %s253 = sand.u32 %s128, 1
        %s254 = smul.addr %s253, 32
        %s255 = scalar_lea.vmem [#allocation9], %s254
        %v256 = vld [vmem:[%s218] sm:$0xff]
        %v257 = vld [vmem:[%s218 + $0x8] sm:$0xff]
        %v258 = vld [vmem:[#allocation5] sm:$0xff]
        %v259 = vld [vmem:[#allocation5 + $0x8] sm:$0xff]
        %v260 = vld [vmem:[#allocation5 + $0x10] sm:$0xff]
        %v261 = vld [vmem:[#allocation5 + $0x18] sm:$0xff]
        %v262 = vld [vmem:[#allocation5 + $0x20] sm:$0xff]
        %v263 = vld [vmem:[#allocation5 + $0x28] sm:$0xff]
        %v264 = vld [vmem:[#allocation5 + $0x30] sm:$0xff]
        %v265 = vld [vmem:[#allocation5 + $0x38] sm:$0xff]
        %v266 = vld [vmem:[#allocation5 + $0x40] sm:$0xff]
        %v267 = vld [vmem:[#allocation5 + $0x48] sm:$0xff]
        %v268 = vld [vmem:[#allocation5 + $0x50] sm:$0xff]
        %v269 = vld [vmem:[#allocation5 + $0x58] sm:$0xff]
        %v270 = vld [vmem:[#allocation5 + $0x60] sm:$0xff]
        %v271 = vld [vmem:[#allocation5 + $0x68] sm:$0xff]
        %v272 = vld [vmem:[#allocation5 + $0x70] sm:$0xff]
        %v273 = vld [vmem:[#allocation5 + $0x78] sm:$0xff]
        %v274 = vld [vmem:[#allocation5 + $0x80] sm:$0xff]
        %v275 = vld [vmem:[#allocation5 + $0x88] sm:$0xff]
        %v276 = vld [vmem:[#allocation5 + $0x90] sm:$0xff]
        %v277 = vld [vmem:[#allocation5 + $0x98] sm:$0xff]
        %v278 = vld [vmem:[#allocation5 + $0xa0] sm:$0xff]
        %v279 = vld [vmem:[#allocation5 + $0xa8] sm:$0xff]
        %v280 = vld [vmem:[#allocation5 + $0xb0] sm:$0xff]
        %v281 = vld [vmem:[#allocation5 + $0xb8] sm:$0xff]
        %v282 = vld [vmem:[#allocation5 + $0xc0] sm:$0xff]
        %v283 = vld [vmem:[#allocation5 + $0xc8] sm:$0xff]
        %v284 = vld [vmem:[#allocation5 + $0xd0] sm:$0xff]
        %v285 = vld [vmem:[#allocation5 + $0xd8] sm:$0xff]
        %v286 = vld [vmem:[#allocation5 + $0xe0] sm:$0xff]
        %v287 = vld [vmem:[#allocation5 + $0xe8] sm:$0xff]
        %v288 = vld [vmem:[#allocation5 + $0xf0] sm:$0xff]
        %v289 = vld [vmem:[#allocation5 + $0xf8] sm:$0xff]
        %v290 = vld [vmem:[#allocation5 + $0x100] sm:$0xff]
        %v291 = vld [vmem:[#allocation5 + $0x108] sm:$0xff]
        %v292 = vld [vmem:[#allocation5 + $0x110] sm:$0xff]
        %v293 = vld [vmem:[#allocation5 + $0x118] sm:$0xff]
        %v294 = vld [vmem:[#allocation5 + $0x120] sm:$0xff]
        %v295 = vld [vmem:[#allocation5 + $0x128] sm:$0xff]
        %v296 = vld [vmem:[#allocation5 + $0x130] sm:$0xff]
        %v297 = vld [vmem:[#allocation5 + $0x138] sm:$0xff]
        %v298 = vld [vmem:[#allocation5 + $0x140] sm:$0xff]
        %v299 = vld [vmem:[#allocation5 + $0x148] sm:$0xff]
        %v300 = vld [vmem:[#allocation5 + $0x150] sm:$0xff]
        %v301 = vld [vmem:[#allocation5 + $0x158] sm:$0xff]
        %v302 = vld [vmem:[#allocation5 + $0x160] sm:$0xff]
        %v303 = vld [vmem:[#allocation5 + $0x168] sm:$0xff]
        %v304 = vld [vmem:[#allocation5 + $0x170] sm:$0xff]
        %v305 = vld [vmem:[#allocation5 + $0x178] sm:$0xff]
        %vm306 = vcmask 261120
        %v308 = vsel %vm306, %v258, 0
        %v311 = vsel %vm306, %v259, 0
        %v314 = vsel %vm306, %v260, 0
        %v317 = vsel %vm306, %v261, 0
        %v320 = vsel %vm306, %v262, 0
        %v323 = vsel %vm306, %v263, 0
        %v326 = vsel %vm306, %v264, 0
        %v329 = vsel %vm306, %v265, 0
        %v332 = vsel %vm306, %v266, 0
        %v335 = vsel %vm306, %v267, 0
        %v338 = vsel %vm306, %v268, 0
        %v341 = vsel %vm306, %v269, 0
        %v344 = vsel %vm306, %v270, 0
        %v347 = vsel %vm306, %v271, 0
        %v350 = vsel %vm306, %v272, 0
        %v353 = vsel %vm306, %v273, 0
        %v356 = vsel %vm306, %v274, 0
        %v359 = vsel %vm306, %v275, 0
        %v362 = vsel %vm306, %v276, 0
        %v365 = vsel %vm306, %v277, 0
        %v368 = vsel %vm306, %v278, 0
        %v371 = vsel %vm306, %v279, 0
        %v374 = vsel %vm306, %v280, 0
        %v377 = vsel %vm306, %v281, 0
        %v380 = vsel %vm306, %v282, 0
        %v383 = vsel %vm306, %v283, 0
        %v386 = vsel %vm306, %v284, 0
        %v389 = vsel %vm306, %v285, 0
        %v392 = vsel %vm306, %v286, 0
        %v395 = vsel %vm306, %v287, 0
        %v398 = vsel %vm306, %v288, 0
        %v401 = vsel %vm306, %v289, 0
        %v404 = vsel %vm306, %v290, 0
        %v407 = vsel %vm306, %v291, 0
        %v410 = vsel %vm306, %v292, 0
        %v413 = vsel %vm306, %v293, 0
        %v416 = vsel %vm306, %v294, 0
        %v419 = vsel %vm306, %v295, 0
        %v422 = vsel %vm306, %v296, 0
        %v425 = vsel %vm306, %v297, 0
        %v428 = vsel %vm306, %v298, 0
        %v431 = vsel %vm306, %v299, 0
        %v434 = vsel %vm306, %v300, 0
        %v437 = vsel %vm306, %v301, 0
        %v440 = vsel %vm306, %v302, 0
        %v443 = vsel %vm306, %v303, 0
        %v446 = vsel %vm306, %v304, 0
        %v449 = vsel %vm306, %v305, 0
        %v452 = vsel %vm306, %v256, 0
        %v455 = vsel %vm306, %v257, 0
        %457 = vmatprep.subr.mxu0 0.0
        %458 = vmatpush1.xpose.msra.mxu0 %v452
        %459 = vmatprep.subr.mxu0 0.0
        %460 = vmatpush1.xpose.msra.mxu0 %v455
        %461 = vmatprep.subr.mxu0 0.0
        %462 = vmatpush1.xpose.msra.mxu0 0.0
        %463 = vmatprep.subr.mxu0 0.0
        %464 = vmatpush1.xpose.msra.mxu0 0.0
        %465 = vmatprep.subr.mxu0 0.0
        %466 = vmatpush1.xpose.msra.mxu0 0.0
        %467 = vmatprep.subr.mxu0 0.0
        %468 = vmatpush1.xpose.msra.mxu0 0.0
        %469 = vmatprep.subr.mxu0 0.0
        %470 = vmatpush1.xpose.msra.mxu0 0.0
        %471 = vmatprep.subr.mxu0 0.0
        %472 = vmatpush1.xpose.msra.mxu0 0.0
        %473 = vmatprep.subr.mxu0 0.0
        %474 = vmatpush1.xpose.msra.mxu0 0.0
        %475 = vmatprep.subr.mxu0 0.0
        %476 = vmatpush1.xpose.msra.mxu0 0.0
        %477 = vmatprep.subr.mxu0 0.0
        %478 = vmatpush1.xpose.msra.mxu0 0.0
        %479 = vmatprep.subr.mxu0 0.0
        %480 = vmatpush1.xpose.msra.mxu0 0.0
        %481 = vmatprep.subr.mxu0 0.0
        %482 = vmatpush1.xpose.msra.mxu0 0.0
        %483 = vmatprep.subr.mxu0 0.0
        %484 = vmatpush1.xpose.msra.mxu0 0.0
        %485 = vmatprep.subr.mxu0 0.0
        %486 = vmatpush1.xpose.msra.mxu0 0.0
        %487 = vmatprep.subr.mxu0 0.0
        %488 = vmatpush1.xpose.msra.mxu0 0.0
        %489 = vmatprep.subr.mxu0 0.0
        %490 = vmatpush1.xpose.msra.mxu0 0.0
        %491 = vmatprep.subr.mxu0 0.0
        %492 = vmatpush1.xpose.msra.mxu0 0.0
        %493 = vmatprep.subr.mxu0 0.0
        %494 = vmatpush1.xpose.msra.mxu0 0.0
        %495 = vmatprep.subr.mxu0 0.0
        %496 = vmatpush1.xpose.msra.mxu0 0.0
        %497 = vmatprep.subr.mxu0 0.0
        %498 = vmatpush1.xpose.msra.mxu0 0.0
        %499 = vmatprep.subr.mxu0 0.0
        %500 = vmatpush1.xpose.msra.mxu0 0.0
        %501 = vmatprep.subr.mxu0 0.0
        %502 = vmatpush1.xpose.msra.mxu0 0.0
        %503 = vmatprep.subr.mxu0 0.0
        %504 = vmatpush1.xpose.msra.mxu0 0.0
        %505 = vmatprep.subr.mxu0 0.0
        %506 = vmatpush1.xpose.msra.mxu0 0.0
        %507 = vmatprep.subr.mxu0 0.0
        %508 = vmatpush1.xpose.msra.mxu0 0.0
        %509 = vmatprep.subr.mxu0 0.0
        %510 = vmatpush1.xpose.msra.mxu0 0.0
        %511 = vmatprep.subr.mxu0 0.0
        %512 = vmatpush1.xpose.msra.mxu0 0.0
        %513 = vmatprep.subr.mxu0 0.0
        %514 = vmatpush1.xpose.msra.mxu0 0.0
        %515 = vmatprep.subr.mxu0 0.0
        %516 = vmatpush1.xpose.msra.mxu0 0.0
        %517 = vmatprep.subr.mxu0 0.0
        %518 = vmatpush1.xpose.msra.mxu0 0.0
        %519 = vmatprep.subr.mxu0 0.0
        %520 = vmatpush1.xpose.msra.mxu0 0.0
        %521 = vmatprep.mubr.f32.mxu0 0.0
        %522 = vmatmul.mubr.f32.gmra.mrb[0].mxu0 %v308
        %v523 = vpop.f32.mrb[0].mxu0
        %v524 = vadd.f32 0.0, %v523
        %v525 = vpop.f32.mrb[0].mxu0
        %526 = vmatprep.mubr.f32.mxu0 0.0
        %527 = vmatmul.mubr.f32.gmra.mrb[0].mxu0 %v311
        %v528 = vpop.f32.mrb[0].mxu0
        %v529 = vadd.f32 0.0, %v528
        %v530 = vpop.f32.mrb[0].mxu0
        %531 = vmatprep.mubr.f32.mxu0 0.0
        %532 = vmatmul.mubr.f32.gmra.mrb[0].mxu0 %v314
        %v533 = vpop.f32.mrb[0].mxu0
        %v534 = vadd.f32 0.0, %v533
        %v535 = vpop.f32.mrb[0].mxu0
        %536 = vmatprep.mubr.f32.mxu0 0.0
        %537 = vmatmul.mubr.f32.gmra.mrb[0].mxu0 %v317
        %v538 = vpop.f32.mrb[0].mxu0
        %v539 = vadd.f32 0.0, %v538
        %v540 = vpop.f32.mrb[0].mxu0
        %541 = vmatprep.mubr.f32.mxu0 0.0
        %542 = vmatmul.mubr.f32.gmra.mrb[0].mxu0 %v320
        %v543 = vpop.f32.mrb[0].mxu0
        %v544 = vadd.f32 0.0, %v543
        %v545 = vpop.f32.mrb[0].mxu0
        %546 = vmatprep.mubr.f32.mxu0 0.0
        %547 = vmatmul.mubr.f32.gmra.mrb[0].mxu0 %v323
        %v548 = vpop.f32.mrb[0].mxu0
        %v549 = vadd.f32 0.0, %v548
        %v550 = vpop.f32.mrb[0].mxu0
        %551 = vmatprep.mubr.f32.mxu0 0.0
        %552 = vmatmul.mubr.f32.gmra.mrb[0].mxu0 %v326
        %v553 = vpop.f32.mrb[0].mxu0
        %v554 = vadd.f32 0.0, %v553
        %v555 = vpop.f32.mrb[0].mxu0
        %556 = vmatprep.mubr.f32.mxu0 0.0
        %557 = vmatmul.mubr.f32.gmra.mrb[0].mxu0 %v329
        %v558 = vpop.f32.mrb[0].mxu0
        %v559 = vadd.f32 0.0, %v558
        %v560 = vpop.f32.mrb[0].mxu0
        %561 = vmatprep.mubr.f32.mxu0 0.0
        %562 = vmatmul.mubr.f32.gmra.mrb[0].mxu0 %v332
        %v563 = vpop.f32.mrb[0].mxu0
        %v564 = vadd.f32 0.0, %v563
        %v565 = vpop.f32.mrb[0].mxu0
        %566 = vmatprep.mubr.f32.mxu0 0.0
        %567 = vmatmul.mubr.f32.gmra.mrb[0].mxu0 %v335
        %v568 = vpop.f32.mrb[0].mxu0
        %v569 = vadd.f32 0.0, %v568
        %v570 = vpop.f32.mrb[0].mxu0
        %571 = vmatprep.mubr.f32.mxu0 0.0
        %572 = vmatmul.mubr.f32.gmra.mrb[0].mxu0 %v338
        %v573 = vpop.f32.mrb[0].mxu0
        %v574 = vadd.f32 0.0, %v573
        %v575 = vpop.f32.mrb[0].mxu0
        %576 = vmatprep.mubr.f32.mxu0 0.0
        %577 = vmatmul.mubr.f32.gmra.mrb[0].mxu0 %v341
        %v578 = vpop.f32.mrb[0].mxu0
        %v579 = vadd.f32 0.0, %v578
        %v580 = vpop.f32.mrb[0].mxu0
        %581 = vmatprep.mubr.f32.mxu0 0.0
        %582 = vmatmul.mubr.f32.gmra.mrb[0].mxu0 %v344
        %v583 = vpop.f32.mrb[0].mxu0
        %v584 = vadd.f32 0.0, %v583
        %v585 = vpop.f32.mrb[0].mxu0
        %586 = vmatprep.mubr.f32.mxu0 0.0
        %587 = vmatmul.mubr.f32.gmra.mrb[0].mxu0 %v347
        %v588 = vpop.f32.mrb[0].mxu0
        %v589 = vadd.f32 0.0, %v588
        %v590 = vpop.f32.mrb[0].mxu0
        %591 = vmatprep.mubr.f32.mxu0 0.0
        %592 = vmatmul.mubr.f32.gmra.mrb[0].mxu0 %v350
        %v593 = vpop.f32.mrb[0].mxu0
        %v594 = vadd.f32 0.0, %v593
        %v595 = vpop.f32.mrb[0].mxu0
        %596 = vmatprep.mubr.f32.mxu0 0.0
        %597 = vmatmul.mubr.f32.gmra.mrb[0].mxu0 %v353
        %v598 = vpop.f32.mrb[0].mxu0
        %v599 = vadd.f32 0.0, %v598
        %v600 = vpop.f32.mrb[0].mxu0
        %601 = vmatprep.mubr.f32.mxu0 0.0
        %602 = vmatmul.mubr.f32.gmra.mrb[0].mxu0 %v356
        %v603 = vpop.f32.mrb[0].mxu0
        %v604 = vadd.f32 0.0, %v603
        %v605 = vpop.f32.mrb[0].mxu0
        %606 = vmatprep.mubr.f32.mxu0 0.0
        %607 = vmatmul.mubr.f32.gmra.mrb[0].mxu0 %v359
        %v608 = vpop.f32.mrb[0].mxu0
        %v609 = vadd.f32 0.0, %v608
        %v610 = vpop.f32.mrb[0].mxu0
        %611 = vmatprep.mubr.f32.mxu0 0.0
        %612 = vmatmul.mubr.f32.gmra.mrb[0].mxu0 %v362
        %v613 = vpop.f32.mrb[0].mxu0
        %v614 = vadd.f32 0.0, %v613
        %v615 = vpop.f32.mrb[0].mxu0
        %616 = vmatprep.mubr.f32.mxu0 0.0
        %617 = vmatmul.mubr.f32.gmra.mrb[0].mxu0 %v365
        %v618 = vpop.f32.mrb[0].mxu0
        %v619 = vadd.f32 0.0, %v618
        %v620 = vpop.f32.mrb[0].mxu0
        %621 = vmatprep.mubr.f32.mxu0 0.0
        %622 = vmatmul.mubr.f32.gmra.mrb[0].mxu0 %v368
        %v623 = vpop.f32.mrb[0].mxu0
        %v624 = vadd.f32 0.0, %v623
        %v625 = vpop.f32.mrb[0].mxu0
        %626 = vmatprep.mubr.f32.mxu0 0.0
        %627 = vmatmul.mubr.f32.gmra.mrb[0].mxu0 %v371
        %v628 = vpop.f32.mrb[0].mxu0
        %v629 = vadd.f32 0.0, %v628
        %v630 = vpop.f32.mrb[0].mxu0
        %631 = vmatprep.mubr.f32.mxu0 0.0
        %632 = vmatmul.mubr.f32.gmra.mrb[0].mxu0 %v374
        %v633 = vpop.f32.mrb[0].mxu0
        %v634 = vadd.f32 0.0, %v633
        %v635 = vpop.f32.mrb[0].mxu0
        %636 = vmatprep.mubr.f32.mxu0 0.0
        %637 = vmatmul.mubr.f32.gmra.mrb[0].mxu0 %v377
        %v638 = vpop.f32.mrb[0].mxu0
        %v639 = vadd.f32 0.0, %v638
        %v640 = vpop.f32.mrb[0].mxu0
        %641 = vmatprep.mubr.f32.mxu0 0.0
        %642 = vmatmul.mubr.f32.gmra.mrb[0].mxu0 %v380
        %v643 = vpop.f32.mrb[0].mxu0
        %v644 = vadd.f32 0.0, %v643
        %v645 = vpop.f32.mrb[0].mxu0
        %646 = vmatprep.mubr.f32.mxu0 0.0
        %647 = vmatmul.mubr.f32.gmra.mrb[0].mxu0 %v383
        %v648 = vpop.f32.mrb[0].mxu0
        %v649 = vadd.f32 0.0, %v648
        %v650 = vpop.f32.mrb[0].mxu0
        %651 = vmatprep.mubr.f32.mxu0 0.0
        %652 = vmatmul.mubr.f32.gmra.mrb[0].mxu0 %v386
        %v653 = vpop.f32.mrb[0].mxu0
        %v654 = vadd.f32 0.0, %v653
        %v655 = vpop.f32.mrb[0].mxu0
        %656 = vmatprep.mubr.f32.mxu0 0.0
        %657 = vmatmul.mubr.f32.gmra.mrb[0].mxu0 %v389
        %v658 = vpop.f32.mrb[0].mxu0
        %v659 = vadd.f32 0.0, %v658
        %v660 = vpop.f32.mrb[0].mxu0
        %661 = vmatprep.mubr.f32.mxu0 0.0
        %662 = vmatmul.mubr.f32.gmra.mrb[0].mxu0 %v392
        %v663 = vpop.f32.mrb[0].mxu0
        %v664 = vadd.f32 0.0, %v663
        %v665 = vpop.f32.mrb[0].mxu0
        %666 = vmatprep.mubr.f32.mxu0 0.0
        %667 = vmatmul.mubr.f32.gmra.mrb[0].mxu0 %v395
        %v668 = vpop.f32.mrb[0].mxu0
        %v669 = vadd.f32 0.0, %v668
        %v670 = vpop.f32.mrb[0].mxu0
        %671 = vmatprep.mubr.f32.mxu0 0.0
        %672 = vmatmul.mubr.f32.gmra.mrb[0].mxu0 %v398
        %v673 = vpop.f32.mrb[0].mxu0
        %v674 = vadd.f32 0.0, %v673
        %v675 = vpop.f32.mrb[0].mxu0
        %676 = vmatprep.mubr.f32.mxu0 0.0
        %677 = vmatmul.mubr.f32.gmra.mrb[0].mxu0 %v401
        %v678 = vpop.f32.mrb[0].mxu0
        %v679 = vadd.f32 0.0, %v678
        %v680 = vpop.f32.mrb[0].mxu0
        %681 = vmatprep.mubr.f32.mxu0 0.0
        %682 = vmatmul.mubr.f32.gmra.mrb[0].mxu0 %v404
        %v683 = vpop.f32.mrb[0].mxu0
        %v684 = vadd.f32 0.0, %v683
        %v685 = vpop.f32.mrb[0].mxu0
        %686 = vmatprep.mubr.f32.mxu0 0.0
        %687 = vmatmul.mubr.f32.gmra.mrb[0].mxu0 %v407
        %v688 = vpop.f32.mrb[0].mxu0
        %v689 = vadd.f32 0.0, %v688
        %v690 = vpop.f32.mrb[0].mxu0
        %691 = vmatprep.mubr.f32.mxu0 0.0
        %692 = vmatmul.mubr.f32.gmra.mrb[0].mxu0 %v410
        %v693 = vpop.f32.mrb[0].mxu0
        %v694 = vadd.f32 0.0, %v693
        %v695 = vpop.f32.mrb[0].mxu0
        %696 = vmatprep.mubr.f32.mxu0 0.0
        %697 = vmatmul.mubr.f32.gmra.mrb[0].mxu0 %v413
        %v698 = vpop.f32.mrb[0].mxu0
        %v699 = vadd.f32 0.0, %v698
        %v700 = vpop.f32.mrb[0].mxu0
        %701 = vmatprep.mubr.f32.mxu0 0.0
        %702 = vmatmul.mubr.f32.gmra.mrb[0].mxu0 %v416
        %v703 = vpop.f32.mrb[0].mxu0
        %v704 = vadd.f32 0.0, %v703
        %v705 = vpop.f32.mrb[0].mxu0
        %706 = vmatprep.mubr.f32.mxu0 0.0
        %707 = vmatmul.mubr.f32.gmra.mrb[0].mxu0 %v419
        %v708 = vpop.f32.mrb[0].mxu0
        %v709 = vadd.f32 0.0, %v708
        %v710 = vpop.f32.mrb[0].mxu0
        %711 = vmatprep.mubr.f32.mxu0 0.0
        %712 = vmatmul.mubr.f32.gmra.mrb[0].mxu0 %v422
        %v713 = vpop.f32.mrb[0].mxu0
        %v714 = vadd.f32 0.0, %v713
        %v715 = vpop.f32.mrb[0].mxu0
        %716 = vmatprep.mubr.f32.mxu0 0.0
        %717 = vmatmul.mubr.f32.gmra.mrb[0].mxu0 %v425
        %v718 = vpop.f32.mrb[0].mxu0
        %v719 = vadd.f32 0.0, %v718
        %v720 = vpop.f32.mrb[0].mxu0
        %721 = vmatprep.mubr.f32.mxu0 0.0
        %722 = vmatmul.mubr.f32.gmra.mrb[0].mxu0 %v428
        %v723 = vpop.f32.mrb[0].mxu0
        %v724 = vadd.f32 0.0, %v723
        %v725 = vpop.f32.mrb[0].mxu0
        %726 = vmatprep.mubr.f32.mxu0 0.0
        %727 = vmatmul.mubr.f32.gmra.mrb[0].mxu0 %v431
        %v728 = vpop.f32.mrb[0].mxu0
        %v729 = vadd.f32 0.0, %v728
        %v730 = vpop.f32.mrb[0].mxu0
        %731 = vmatprep.mubr.f32.mxu0 0.0
        %732 = vmatmul.mubr.f32.gmra.mrb[0].mxu0 %v434
        %v733 = vpop.f32.mrb[0].mxu0
        %v734 = vadd.f32 0.0, %v733
        %v735 = vpop.f32.mrb[0].mxu0
        %736 = vmatprep.mubr.f32.mxu0 0.0
        %737 = vmatmul.mubr.f32.gmra.mrb[0].mxu0 %v437
        %v738 = vpop.f32.mrb[0].mxu0
        %v739 = vadd.f32 0.0, %v738
        %v740 = vpop.f32.mrb[0].mxu0
        %741 = vmatprep.mubr.f32.mxu0 0.0
        %742 = vmatmul.mubr.f32.gmra.mrb[0].mxu0 %v440
        %v743 = vpop.f32.mrb[0].mxu0
        %v744 = vadd.f32 0.0, %v743
        %v745 = vpop.f32.mrb[0].mxu0
        %746 = vmatprep.mubr.f32.mxu0 0.0
        %747 = vmatmul.mubr.f32.gmra.mrb[0].mxu0 %v443
        %v748 = vpop.f32.mrb[0].mxu0
        %v749 = vadd.f32 0.0, %v748
        %v750 = vpop.f32.mrb[0].mxu0
        %751 = vmatprep.mubr.f32.mxu0 0.0
        %752 = vmatmul.mubr.f32.gmra.mrb[0].mxu0 %v446
        %v753 = vpop.f32.mrb[0].mxu0
        %v754 = vadd.f32 0.0, %v753
        %v755 = vpop.f32.mrb[0].mxu0
        %756 = vmatprep.mubr.f32.mxu0 0.0
        %757 = vmatmul.mubr.f32.gmra.mrb[0].mxu0 %v449
        %v758 = vpop.f32.mrb[0].mxu0
        %v759 = vadd.f32 0.0, %v758
        %v760 = vpop.f32.mrb[0].mxu0
        %761 = vdwg.mxu0
        %vm762 = vcmask 130048
        %v764 = vsel %vm762, %v524, 0
        %v767 = vsel %vm762, %v529, 0
        %v770 = vsel %vm762, %v534, 0
        %v773 = vsel %vm762, %v539, 0
        %v776 = vsel %vm762, %v604, 0
        %v779 = vsel %vm762, %v609, 0
        %v782 = vsel %vm762, %v614, 0
        %v785 = vsel %vm762, %v619, 0
        %787 = vmatprep.subr.mxu0 0.0
        %788 = vmatpush1.xpose.msra.mxu0 %v776
        %789 = vmatprep.subr.mxu0 0.0
        %790 = vmatpush1.xpose.msra.mxu0 %v779
        %791 = vmatprep.subr.mxu0 0.0
        %792 = vmatpush1.xpose.msra.mxu0 %v782
        %793 = vmatprep.subr.mxu0 0.0
        %794 = vmatpush1.xpose.msra.mxu0 %v785
        %795 = vmatprep.subr.mxu0 0.0
        %796 = vmatpush1.xpose.msra.mxu0 0.0
        %797 = vmatprep.subr.mxu0 0.0
        %798 = vmatpush1.xpose.msra.mxu0 0.0
        %799 = vmatprep.subr.mxu0 0.0
        %800 = vmatpush1.xpose.msra.mxu0 0.0
        %801 = vmatprep.subr.mxu0 0.0
        %802 = vmatpush1.xpose.msra.mxu0 0.0
        %803 = vmatprep.subr.mxu0 0.0
        %804 = vmatpush1.xpose.msra.mxu0 0.0
        %805 = vmatprep.subr.mxu0 0.0
        %806 = vmatpush1.xpose.msra.mxu0 0.0
        %807 = vmatprep.subr.mxu0 0.0
        %808 = vmatpush1.xpose.msra.mxu0 0.0
        %809 = vmatprep.subr.mxu0 0.0
        %810 = vmatpush1.xpose.msra.mxu0 0.0
        %811 = vmatprep.subr.mxu0 0.0
        %812 = vmatpush1.xpose.msra.mxu0 0.0
        %813 = vmatprep.subr.mxu0 0.0
        %814 = vmatpush1.xpose.msra.mxu0 0.0
        %815 = vmatprep.subr.mxu0 0.0
        %816 = vmatpush1.xpose.msra.mxu0 0.0
        %817 = vmatprep.subr.mxu0 0.0
        %818 = vmatpush1.xpose.msra.mxu0 0.0
        %819 = vmatprep.subr.mxu0 0.0
        %820 = vmatpush1.xpose.msra.mxu0 0.0
        %821 = vmatprep.subr.mxu0 0.0
        %822 = vmatpush1.xpose.msra.mxu0 0.0
        %823 = vmatprep.subr.mxu0 0.0
        %824 = vmatpush1.xpose.msra.mxu0 0.0
        %825 = vmatprep.subr.mxu0 0.0
        %826 = vmatpush1.xpose.msra.mxu0 0.0
        %827 = vmatprep.subr.mxu0 0.0
        %828 = vmatpush1.xpose.msra.mxu0 0.0
        %829 = vmatprep.subr.mxu0 0.0
        %830 = vmatpush1.xpose.msra.mxu0 0.0
        %831 = vmatprep.subr.mxu0 0.0
        %832 = vmatpush1.xpose.msra.mxu0 0.0
        %833 = vmatprep.subr.mxu0 0.0
        %834 = vmatpush1.xpose.msra.mxu0 0.0
        %835 = vmatprep.subr.mxu0 0.0
        %836 = vmatpush1.xpose.msra.mxu0 0.0
        %837 = vmatprep.subr.mxu0 0.0
        %838 = vmatpush1.xpose.msra.mxu0 0.0
        %839 = vmatprep.subr.mxu0 0.0
        %840 = vmatpush1.xpose.msra.mxu0 0.0
        %841 = vmatprep.subr.mxu0 0.0
        %842 = vmatpush1.xpose.msra.mxu0 0.0
        %843 = vmatprep.subr.mxu0 0.0
        %844 = vmatpush1.xpose.msra.mxu0 0.0
        %845 = vmatprep.subr.mxu0 0.0
        %846 = vmatpush1.xpose.msra.mxu0 0.0
        %847 = vmatprep.subr.mxu0 0.0
        %848 = vmatpush1.xpose.msra.mxu0 0.0
        %849 = vmatprep.subr.mxu0 0.0
        %850 = vmatpush1.xpose.msra.mxu0 0.0
        %851 = vmatprep.mubr.f32.mxu0 0.0
        %852 = vmatmul.mubr.f32.gmra.mrb[0].mxu0 %v764
        %v853 = vpop.f32.mrb[0].mxu0
        %v854 = vadd.f32 0.0, %v853
        %v855 = vpop.f32.mrb[0].mxu0
        %856 = vmatprep.mubr.f32.mxu0 0.0
        %857 = vmatmul.mubr.f32.gmra.mrb[0].mxu0 %v767
        %v858 = vpop.f32.mrb[0].mxu0
        %v859 = vadd.f32 0.0, %v858
        %v860 = vpop.f32.mrb[0].mxu0
        %861 = vmatprep.mubr.f32.mxu0 0.0
        %862 = vmatmul.mubr.f32.gmra.mrb[0].mxu0 %v770
        %v863 = vpop.f32.mrb[0].mxu0
        %v864 = vadd.f32 0.0, %v863
        %v865 = vpop.f32.mrb[0].mxu0
        %866 = vmatprep.mubr.f32.mxu0 0.0
        %867 = vmatmul.mubr.f32.gmra.mrb[0].mxu0 %v773
        %v868 = vpop.f32.mrb[0].mxu0
        %v869 = vadd.f32 0.0, %v868
        %v870 = vpop.f32.mrb[0].mxu0
        %871 = vdwg.mxu0
        %v873 = vsel %vm762, %v544, 0
        %v876 = vsel %vm762, %v549, 0
        %v879 = vsel %vm762, %v554, 0
        %v882 = vsel %vm762, %v559, 0
        %v885 = vsel %vm762, %v624, 0
        %v888 = vsel %vm762, %v629, 0
        %v891 = vsel %vm762, %v634, 0
        %v894 = vsel %vm762, %v639, 0
        %896 = vmatprep.subr.mxu0 0.0
        %897 = vmatpush1.xpose.msra.mxu0 %v885
        %898 = vmatprep.subr.mxu0 0.0
        %899 = vmatpush1.xpose.msra.mxu0 %v888
        %900 = vmatprep.subr.mxu0 0.0
        %901 = vmatpush1.xpose.msra.mxu0 %v891
        %902 = vmatprep.subr.mxu0 0.0
        %903 = vmatpush1.xpose.msra.mxu0 %v894
        %904 = vmatprep.subr.mxu0 0.0
        %905 = vmatpush1.xpose.msra.mxu0 0.0
        %906 = vmatprep.subr.mxu0 0.0
        %907 = vmatpush1.xpose.msra.mxu0 0.0
        %908 = vmatprep.subr.mxu0 0.0
        %909 = vmatpush1.xpose.msra.mxu0 0.0
        %910 = vmatprep.subr.mxu0 0.0
        %911 = vmatpush1.xpose.msra.mxu0 0.0
        %912 = vmatprep.subr.mxu0 0.0
        %913 = vmatpush1.xpose.msra.mxu0 0.0
        %914 = vmatprep.subr.mxu0 0.0
        %915 = vmatpush1.xpose.msra.mxu0 0.0
        %916 = vmatprep.subr.mxu0 0.0
        %917 = vmatpush1.xpose.msra.mxu0 0.0
        %918 = vmatprep.subr.mxu0 0.0
        %919 = vmatpush1.xpose.msra.mxu0 0.0
        %920 = vmatprep.subr.mxu0 0.0
        %921 = vmatpush1.xpose.msra.mxu0 0.0
        %922 = vmatprep.subr.mxu0 0.0
        %923 = vmatpush1.xpose.msra.mxu0 0.0
        %924 = vmatprep.subr.mxu0 0.0
        %925 = vmatpush1.xpose.msra.mxu0 0.0
        %926 = vmatprep.subr.mxu0 0.0
        %927 = vmatpush1.xpose.msra.mxu0 0.0
        %928 = vmatprep.subr.mxu0 0.0
        %929 = vmatpush1.xpose.msra.mxu0 0.0
        %930 = vmatprep.subr.mxu0 0.0
        %931 = vmatpush1.xpose.msra.mxu0 0.0
        %932 = vmatprep.subr.mxu0 0.0
        %933 = vmatpush1.xpose.msra.mxu0 0.0
        %934 = vmatprep.subr.mxu0 0.0
        %935 = vmatpush1.xpose.msra.mxu0 0.0
        %936 = vmatprep.subr.mxu0 0.0
        %937 = vmatpush1.xpose.msra.mxu0 0.0
        %938 = vmatprep.subr.mxu0 0.0
        %939 = vmatpush1.xpose.msra.mxu0 0.0
        %940 = vmatprep.subr.mxu0 0.0
        %941 = vmatpush1.xpose.msra.mxu0 0.0
        %942 = vmatprep.subr.mxu0 0.0
        %943 = vmatpush1.xpose.msra.mxu0 0.0
        %944 = vmatprep.subr.mxu0 0.0
        %945 = vmatpush1.xpose.msra.mxu0 0.0
        %946 = vmatprep.subr.mxu0 0.0
        %947 = vmatpush1.xpose.msra.mxu0 0.0
        %948 = vmatprep.subr.mxu0 0.0
        %949 = vmatpush1.xpose.msra.mxu0 0.0
        %950 = vmatprep.subr.mxu0 0.0
        %951 = vmatpush1.xpose.msra.mxu0 0.0
        %952 = vmatprep.subr.mxu0 0.0
        %953 = vmatpush1.xpose.msra.mxu0 0.0
        %954 = vmatprep.subr.mxu0 0.0
        %955 = vmatpush1.xpose.msra.mxu0 0.0
        %956 = vmatprep.subr.mxu0 0.0
        %957 = vmatpush1.xpose.msra.mxu0 0.0
        %958 = vmatprep.subr.mxu0 0.0
        %959 = vmatpush1.xpose.msra.mxu0 0.0
        %960 = vmatprep.mubr.f32.mxu0 0.0
        %961 = vmatmul.mubr.f32.gmra.mrb[0].mxu0 %v873
        %v962 = vpop.f32.mrb[0].mxu0
        %v963 = vadd.f32 0.0, %v962
        %v964 = vpop.f32.mrb[0].mxu0
        %965 = vmatprep.mubr.f32.mxu0 0.0
        %966 = vmatmul.mubr.f32.gmra.mrb[0].mxu0 %v876
        %v967 = vpop.f32.mrb[0].mxu0
        %v968 = vadd.f32 0.0, %v967
        %v969 = vpop.f32.mrb[0].mxu0
        %970 = vmatprep.mubr.f32.mxu0 0.0
        %971 = vmatmul.mubr.f32.gmra.mrb[0].mxu0 %v879
        %v972 = vpop.f32.mrb[0].mxu0
        %v973 = vadd.f32 0.0, %v972
        %v974 = vpop.f32.mrb[0].mxu0
        %975 = vmatprep.mubr.f32.mxu0 0.0
        %976 = vmatmul.mubr.f32.gmra.mrb[0].mxu0 %v882
        %v977 = vpop.f32.mrb[0].mxu0
        %v978 = vadd.f32 0.0, %v977
        %v979 = vpop.f32.mrb[0].mxu0
        %980 = vdwg.mxu0
        %v982 = vsel %vm762, %v564, 0
        %v985 = vsel %vm762, %v569, 0
        %v988 = vsel %vm762, %v574, 0
        %v991 = vsel %vm762, %v579, 0
        %v994 = vsel %vm762, %v644, 0
        %v997 = vsel %vm762, %v649, 0
        %v1000 = vsel %vm762, %v654, 0
        %v1003 = vsel %vm762, %v659, 0
        %1005 = vmatprep.subr.mxu0 0.0
        %1006 = vmatpush1.xpose.msra.mxu0 %v994
        %1007 = vmatprep.subr.mxu0 0.0
        %1008 = vmatpush1.xpose.msra.mxu0 %v997
        %1009 = vmatprep.subr.mxu0 0.0
        %1010 = vmatpush1.xpose.msra.mxu0 %v1000
        %1011 = vmatprep.subr.mxu0 0.0
        %1012 = vmatpush1.xpose.msra.mxu0 %v1003
        %1013 = vmatprep.subr.mxu0 0.0
        %1014 = vmatpush1.xpose.msra.mxu0 0.0
        %1015 = vmatprep.subr.mxu0 0.0
        %1016 = vmatpush1.xpose.msra.mxu0 0.0
        %1017 = vmatprep.subr.mxu0 0.0
        %1018 = vmatpush1.xpose.msra.mxu0 0.0
        %1019 = vmatprep.subr.mxu0 0.0
        %1020 = vmatpush1.xpose.msra.mxu0 0.0
        %1021 = vmatprep.subr.mxu0 0.0
        %1022 = vmatpush1.xpose.msra.mxu0 0.0
        %1023 = vmatprep.subr.mxu0 0.0
        %1024 = vmatpush1.xpose.msra.mxu0 0.0
        %1025 = vmatprep.subr.mxu0 0.0
        %1026 = vmatpush1.xpose.msra.mxu0 0.0
        %1027 = vmatprep.subr.mxu0 0.0
        %1028 = vmatpush1.xpose.msra.mxu0 0.0
        %1029 = vmatprep.subr.mxu0 0.0
        %1030 = vmatpush1.xpose.msra.mxu0 0.0
        %1031 = vmatprep.subr.mxu0 0.0
        %1032 = vmatpush1.xpose.msra.mxu0 0.0
        %1033 = vmatprep.subr.mxu0 0.0
        %1034 = vmatpush1.xpose.msra.mxu0 0.0
        %1035 = vmatprep.subr.mxu0 0.0
        %1036 = vmatpush1.xpose.msra.mxu0 0.0
        %1037 = vmatprep.subr.mxu0 0.0
        %1038 = vmatpush1.xpose.msra.mxu0 0.0
        %1039 = vmatprep.subr.mxu0 0.0
        %1040 = vmatpush1.xpose.msra.mxu0 0.0
        %1041 = vmatprep.subr.mxu0 0.0
        %1042 = vmatpush1.xpose.msra.mxu0 0.0
        %1043 = vmatprep.subr.mxu0 0.0
        %1044 = vmatpush1.xpose.msra.mxu0 0.0
        %1045 = vmatprep.subr.mxu0 0.0
        %1046 = vmatpush1.xpose.msra.mxu0 0.0
        %1047 = vmatprep.subr.mxu0 0.0
        %1048 = vmatpush1.xpose.msra.mxu0 0.0
        %1049 = vmatprep.subr.mxu0 0.0
        %1050 = vmatpush1.xpose.msra.mxu0 0.0
        %1051 = vmatprep.subr.mxu0 0.0
        %1052 = vmatpush1.xpose.msra.mxu0 0.0
        %1053 = vmatprep.subr.mxu0 0.0
        %1054 = vmatpush1.xpose.msra.mxu0 0.0
        %1055 = vmatprep.subr.mxu0 0.0
        %1056 = vmatpush1.xpose.msra.mxu0 0.0
        %1057 = vmatprep.subr.mxu0 0.0
        %1058 = vmatpush1.xpose.msra.mxu0 0.0
        %1059 = vmatprep.subr.mxu0 0.0
        %1060 = vmatpush1.xpose.msra.mxu0 0.0
        %1061 = vmatprep.subr.mxu0 0.0
        %1062 = vmatpush1.xpose.msra.mxu0 0.0
        %1063 = vmatprep.subr.mxu0 0.0
        %1064 = vmatpush1.xpose.msra.mxu0 0.0
        %1065 = vmatprep.subr.mxu0 0.0
        %1066 = vmatpush1.xpose.msra.mxu0 0.0
        %1067 = vmatprep.subr.mxu0 0.0
        %1068 = vmatpush1.xpose.msra.mxu0 0.0
        %1069 = vmatprep.mubr.f32.mxu0 0.0
        %1070 = vmatmul.mubr.f32.gmra.mrb[0].mxu0 %v982
        %v1071 = vpop.f32.mrb[0].mxu0
        %v1072 = vadd.f32 0.0, %v1071
        %v1073 = vpop.f32.mrb[0].mxu0
        %1074 = vmatprep.mubr.f32.mxu0 0.0
        %1075 = vmatmul.mubr.f32.gmra.mrb[0].mxu0 %v985
        %v1076 = vpop.f32.mrb[0].mxu0
        %v1077 = vadd.f32 0.0, %v1076
        %v1078 = vpop.f32.mrb[0].mxu0
        %1079 = vmatprep.mubr.f32.mxu0 0.0
        %1080 = vmatmul.mubr.f32.gmra.mrb[0].mxu0 %v988
        %v1081 = vpop.f32.mrb[0].mxu0
        %v1082 = vadd.f32 0.0, %v1081
        %v1083 = vpop.f32.mrb[0].mxu0
        %1084 = vmatprep.mubr.f32.mxu0 0.0
        %1085 = vmatmul.mubr.f32.gmra.mrb[0].mxu0 %v991
        %v1086 = vpop.f32.mrb[0].mxu0
        %v1087 = vadd.f32 0.0, %v1086
        %v1088 = vpop.f32.mrb[0].mxu0
        %1089 = vdwg.mxu0
        %v1091 = vsel %vm762, %v584, 0
        %v1094 = vsel %vm762, %v589, 0
        %v1097 = vsel %vm762, %v594, 0
        %v1100 = vsel %vm762, %v599, 0
        %v1103 = vsel %vm762, %v664, 0
        %v1106 = vsel %vm762, %v669, 0
        %v1109 = vsel %vm762, %v674, 0
        %v1112 = vsel %vm762, %v679, 0
        %1114 = vmatprep.subr.mxu0 0.0
        %1115 = vmatpush1.xpose.msra.mxu0 %v1103
        %1116 = vmatprep.subr.mxu0 0.0
        %1117 = vmatpush1.xpose.msra.mxu0 %v1106
        %1118 = vmatprep.subr.mxu0 0.0
        %1119 = vmatpush1.xpose.msra.mxu0 %v1109
        %1120 = vmatprep.subr.mxu0 0.0
        %1121 = vmatpush1.xpose.msra.mxu0 %v1112
        %1122 = vmatprep.subr.mxu0 0.0
        %1123 = vmatpush1.xpose.msra.mxu0 0.0
        %1124 = vmatprep.subr.mxu0 0.0
        %1125 = vmatpush1.xpose.msra.mxu0 0.0
        %1126 = vmatprep.subr.mxu0 0.0
        %1127 = vmatpush1.xpose.msra.mxu0 0.0
        %1128 = vmatprep.subr.mxu0 0.0
        %1129 = vmatpush1.xpose.msra.mxu0 0.0
        %1130 = vmatprep.subr.mxu0 0.0
        %1131 = vmatpush1.xpose.msra.mxu0 0.0
        %1132 = vmatprep.subr.mxu0 0.0
        %1133 = vmatpush1.xpose.msra.mxu0 0.0
        %1134 = vmatprep.subr.mxu0 0.0
        %1135 = vmatpush1.xpose.msra.mxu0 0.0
        %1136 = vmatprep.subr.mxu0 0.0
        %1137 = vmatpush1.xpose.msra.mxu0 0.0
        %1138 = vmatprep.subr.mxu0 0.0
        %1139 = vmatpush1.xpose.msra.mxu0 0.0
        %1140 = vmatprep.subr.mxu0 0.0
        %1141 = vmatpush1.xpose.msra.mxu0 0.0
        %1142 = vmatprep.subr.mxu0 0.0
        %1143 = vmatpush1.xpose.msra.mxu0 0.0
        %1144 = vmatprep.subr.mxu0 0.0
        %1145 = vmatpush1.xpose.msra.mxu0 0.0
        %1146 = vmatprep.subr.mxu0 0.0
        %1147 = vmatpush1.xpose.msra.mxu0 0.0
        %1148 = vmatprep.subr.mxu0 0.0
        %1149 = vmatpush1.xpose.msra.mxu0 0.0
        %1150 = vmatprep.subr.mxu0 0.0
        %1151 = vmatpush1.xpose.msra.mxu0 0.0
        %1152 = vmatprep.subr.mxu0 0.0
        %1153 = vmatpush1.xpose.msra.mxu0 0.0
        %1154 = vmatprep.subr.mxu0 0.0
        %1155 = vmatpush1.xpose.msra.mxu0 0.0
        %1156 = vmatprep.subr.mxu0 0.0
        %1157 = vmatpush1.xpose.msra.mxu0 0.0
        %1158 = vmatprep.subr.mxu0 0.0
        %1159 = vmatpush1.xpose.msra.mxu0 0.0
        %1160 = vmatprep.subr.mxu0 0.0
        %1161 = vmatpush1.xpose.msra.mxu0 0.0
        %1162 = vmatprep.subr.mxu0 0.0
        %1163 = vmatpush1.xpose.msra.mxu0 0.0
        %1164 = vmatprep.subr.mxu0 0.0
        %1165 = vmatpush1.xpose.msra.mxu0 0.0
        %1166 = vmatprep.subr.mxu0 0.0
        %1167 = vmatpush1.xpose.msra.mxu0 0.0
        %1168 = vmatprep.subr.mxu0 0.0
        %1169 = vmatpush1.xpose.msra.mxu0 0.0
        %1170 = vmatprep.subr.mxu0 0.0
        %1171 = vmatpush1.xpose.msra.mxu0 0.0
        %1172 = vmatprep.subr.mxu0 0.0
        %1173 = vmatpush1.xpose.msra.mxu0 0.0
        %1174 = vmatprep.subr.mxu0 0.0
        %1175 = vmatpush1.xpose.msra.mxu0 0.0
        %1176 = vmatprep.subr.mxu0 0.0
        %1177 = vmatpush1.xpose.msra.mxu0 0.0
        %1178 = vmatprep.mubr.f32.mxu0 0.0
        %1179 = vmatmul.mubr.f32.gmra.mrb[0].mxu0 %v1091
        %v1180 = vpop.f32.mrb[0].mxu0
        %v1181 = vadd.f32 0.0, %v1180
        %v1182 = vpop.f32.mrb[0].mxu0
        %1183 = vmatprep.mubr.f32.mxu0 0.0
        %1184 = vmatmul.mubr.f32.gmra.mrb[0].mxu0 %v1094
        %v1185 = vpop.f32.mrb[0].mxu0
        %v1186 = vadd.f32 0.0, %v1185
        %v1187 = vpop.f32.mrb[0].mxu0
        %1188 = vmatprep.mubr.f32.mxu0 0.0
        %1189 = vmatmul.mubr.f32.gmra.mrb[0].mxu0 %v1097
        %v1190 = vpop.f32.mrb[0].mxu0
        %v1191 = vadd.f32 0.0, %v1190
        %v1192 = vpop.f32.mrb[0].mxu0
        %1193 = vmatprep.mubr.f32.mxu0 0.0
        %1194 = vmatmul.mubr.f32.gmra.mrb[0].mxu0 %v1100
        %v1195 = vpop.f32.mrb[0].mxu0
        %v1196 = vadd.f32 0.0, %v1195
        %v1197 = vpop.f32.mrb[0].mxu0
        %1198 = vdwg.mxu0
        %v1199 = vmul.f32 %v854, 0.17677669
        %v1200 = vmul.f32 %v859, 0.17677669
        %v1201 = vmul.f32 %v864, 0.17677669
        %v1202 = vmul.f32 %v869, 0.17677669
        %v1203 = vmul.f32 %v963, 0.17677669
        %v1204 = vmul.f32 %v968, 0.17677669
        %v1205 = vmul.f32 %v973, 0.17677669
        %v1206 = vmul.f32 %v978, 0.17677669
        %v1207 = vmul.f32 %v1072, 0.17677669
        %v1208 = vmul.f32 %v1077, 0.17677669
        %v1209 = vmul.f32 %v1082, 0.17677669
        %v1210 = vmul.f32 %v1087, 0.17677669
        %v1211 = vmul.f32 %v1181, 0.17677669
        %v1212 = vmul.f32 %v1186, 0.17677669
        %v1213 = vmul.f32 %v1191, 0.17677669
        %v1214 = vmul.f32 %v1196, 0.17677669
        %v1215 = vsel %vm306, %v1199, 0.0
        %1216 = vadd.xlane.f32.xlu0 %v1215
        %v1217 = vpop.xlane.xlu0 %1216
        %v1218 = vsel %vm306, %v1200, 0.0
        %1219 = vadd.xlane.f32.xlu0 %v1218
        %v1220 = vpop.xlane.xlu0 %1219
        %v1221 = vsel %vm306, %v1201, 0.0
        %1222 = vadd.xlane.f32.xlu0 %v1221
        %v1223 = vpop.xlane.xlu0 %1222
        %v1224 = vsel %vm306, %v1202, 0.0
        %1225 = vadd.xlane.f32.xlu0 %v1224
        %v1226 = vpop.xlane.xlu0 %1225
        %v1227 = vsel %vm306, %v1203, 0.0
        %1228 = vadd.xlane.f32.xlu0 %v1227
        %v1229 = vpop.xlane.xlu0 %1228
        %v1230 = vsel %vm306, %v1204, 0.0
        %1231 = vadd.xlane.f32.xlu0 %v1230
        %v1232 = vpop.xlane.xlu0 %1231
        %v1233 = vsel %vm306, %v1205, 0.0
        %1234 = vadd.xlane.f32.xlu0 %v1233
        %v1235 = vpop.xlane.xlu0 %1234
        %v1236 = vsel %vm306, %v1206, 0.0
        %1237 = vadd.xlane.f32.xlu0 %v1236
        %v1238 = vpop.xlane.xlu0 %1237
        %v1239 = vsel %vm306, %v1207, 0.0
        %1240 = vadd.xlane.f32.xlu0 %v1239
        %v1241 = vpop.xlane.xlu0 %1240
        %v1242 = vsel %vm306, %v1208, 0.0
        %1243 = vadd.xlane.f32.xlu0 %v1242
        %v1244 = vpop.xlane.xlu0 %1243
        %v1245 = vsel %vm306, %v1209, 0.0
        %1246 = vadd.xlane.f32.xlu0 %v1245
        %v1247 = vpop.xlane.xlu0 %1246
        %v1248 = vsel %vm306, %v1210, 0.0
        %1249 = vadd.xlane.f32.xlu0 %v1248
        %v1250 = vpop.xlane.xlu0 %1249
        %v1251 = vsel %vm306, %v1211, 0.0
        %1252 = vadd.xlane.f32.xlu0 %v1251
        %v1253 = vpop.xlane.xlu0 %1252
        %v1254 = vsel %vm306, %v1212, 0.0
        %1255 = vadd.xlane.f32.xlu0 %v1254
        %v1256 = vpop.xlane.xlu0 %1255
        %v1257 = vsel %vm306, %v1213, 0.0
        %1258 = vadd.xlane.f32.xlu0 %v1257
        %v1259 = vpop.xlane.xlu0 %1258
        %v1260 = vsel %vm306, %v1214, 0.0
        %1261 = vadd.xlane.f32.xlu0 %v1260
        %v1262 = vpop.xlane.xlu0 %1261
        %v1263 = vadd.f32 %v1217, %v1220
        %v1264 = vadd.f32 %v1263, %v1223
        %v1265 = vadd.f32 %v1264, %v1226
        %v1266 = vrot.slane %v1265, 4
        %v1267 = vadd.f32 %v1265, %v1266
        %v1268 = vrot.slane %v1267, 2
        %v1269 = vadd.f32 %v1267, %v1268
        %v1270 = vrot.slane %v1269, 1
        %v1271 = vadd.f32 %v1269, %v1270
        %v1272 = vadd.f32 %v1229, %v1232
        %v1273 = vadd.f32 %v1272, %v1235
        %v1274 = vadd.f32 %v1273, %v1238
        %v1275 = vrot.slane %v1274, 4
        %v1276 = vadd.f32 %v1274, %v1275
        %v1277 = vrot.slane %v1276, 2
        %v1278 = vadd.f32 %v1276, %v1277
        %v1279 = vrot.slane %v1278, 1
        %v1280 = vadd.f32 %v1278, %v1279
        %v1281 = vadd.f32 %v1241, %v1244
        %v1282 = vadd.f32 %v1281, %v1247
        %v1283 = vadd.f32 %v1282, %v1250
        %v1284 = vrot.slane %v1283, 4
        %v1285 = vadd.f32 %v1283, %v1284
        %v1286 = vrot.slane %v1285, 2
        %v1287 = vadd.f32 %v1285, %v1286
        %v1288 = vrot.slane %v1287, 1
        %v1289 = vadd.f32 %v1287, %v1288
        %v1290 = vadd.f32 %v1253, %v1256
        %v1291 = vadd.f32 %v1290, %v1259
        %v1292 = vadd.f32 %v1291, %v1262
        %v1293 = vrot.slane %v1292, 4
        %v1294 = vadd.f32 %v1292, %v1293
        %v1295 = vrot.slane %v1294, 2
        %v1296 = vadd.f32 %v1294, %v1295
        %v1297 = vrot.slane %v1296, 1
        %v1298 = vadd.f32 %v1296, %v1297
        %v1299 = vmul.f32 %v1271, 0.0009765625
        %v1300 = vmul.f32 %v1280, 0.0009765625
        %v1301 = vmul.f32 %v1289, 0.0009765625
        %v1302 = vmul.f32 %v1298, 0.0009765625
        %v1303 = vmul.f32 %v1199, %v1199
        %v1304 = vmul.f32 %v1200, %v1200
        %v1305 = vmul.f32 %v1201, %v1201
        %v1306 = vmul.f32 %v1202, %v1202
        %v1307 = vmul.f32 %v1203, %v1203
        %v1308 = vmul.f32 %v1204, %v1204
        %v1309 = vmul.f32 %v1205, %v1205
        %v1310 = vmul.f32 %v1206, %v1206
        %v1311 = vmul.f32 %v1207, %v1207
        %v1312 = vmul.f32 %v1208, %v1208
        %v1313 = vmul.f32 %v1209, %v1209
        %v1314 = vmul.f32 %v1210, %v1210
        %v1315 = vmul.f32 %v1211, %v1211
        %v1316 = vmul.f32 %v1212, %v1212
        %v1317 = vmul.f32 %v1213, %v1213
        %v1318 = vmul.f32 %v1214, %v1214
        %v1319 = vsel %vm306, %v1303, 0.0
        %1320 = vadd.xlane.f32.xlu0 %v1319
        %v1321 = vpop.xlane.xlu0 %1320
        %v1322 = vsel %vm306, %v1304, 0.0
        %1323 = vadd.xlane.f32.xlu0 %v1322
        %v1324 = vpop.xlane.xlu0 %1323
        %v1325 = vsel %vm306, %v1305, 0.0
        %1326 = vadd.xlane.f32.xlu0 %v1325
        %v1327 = vpop.xlane.xlu0 %1326
        %v1328 = vsel %vm306, %v1306, 0.0
        %1329 = vadd.xlane.f32.xlu0 %v1328
        %v1330 = vpop.xlane.xlu0 %1329
        %v1331 = vsel %vm306, %v1307, 0.0
        %1332 = vadd.xlane.f32.xlu0 %v1331
        %v1333 = vpop.xlane.xlu0 %1332
        %v1334 = vsel %vm306, %v1308, 0.0
        %1335 = vadd.xlane.f32.xlu0 %v1334
        %v1336 = vpop.xlane.xlu0 %1335
        %v1337 = vsel %vm306, %v1309, 0.0
        %1338 = vadd.xlane.f32.xlu0 %v1337
        %v1339 = vpop.xlane.xlu0 %1338
        %v1340 = vsel %vm306, %v1310, 0.0
        %1341 = vadd.xlane.f32.xlu0 %v1340
        %v1342 = vpop.xlane.xlu0 %1341
        %v1343 = vsel %vm306, %v1311, 0.0
        %1344 = vadd.xlane.f32.xlu0 %v1343
        %v1345 = vpop.xlane.xlu0 %1344
        %v1346 = vsel %vm306, %v1312, 0.0
        %1347 = vadd.xlane.f32.xlu0 %v1346
        %v1348 = vpop.xlane.xlu0 %1347
        %v1349 = vsel %vm306, %v1313, 0.0
        %1350 = vadd.xlane.f32.xlu0 %v1349
        %v1351 = vpop.xlane.xlu0 %1350
        %v1352 = vsel %vm306, %v1314, 0.0
        %1353 = vadd.xlane.f32.xlu0 %v1352
        %v1354 = vpop.xlane.xlu0 %1353
        %v1355 = vsel %vm306, %v1315, 0.0
        %1356 = vadd.xlane.f32.xlu0 %v1355
        %v1357 = vpop.xlane.xlu0 %1356
        %v1358 = vsel %vm306, %v1316, 0.0
        %1359 = vadd.xlane.f32.xlu0 %v1358
        %v1360 = vpop.xlane.xlu0 %1359
        %v1361 = vsel %vm306, %v1317, 0.0
        %1362 = vadd.xlane.f32.xlu0 %v1361
        %v1363 = vpop.xlane.xlu0 %1362
        %v1364 = vsel %vm306, %v1318, 0.0
        %1365 = vadd.xlane.f32.xlu0 %v1364
        %v1366 = vpop.xlane.xlu0 %1365
        %v1367 = vadd.f32 %v1321, %v1324
        %v1368 = vadd.f32 %v1367, %v1327
        %v1369 = vadd.f32 %v1368, %v1330
        %v1370 = vrot.slane %v1369, 4
        %v1371 = vadd.f32 %v1369, %v1370
        %v1372 = vrot.slane %v1371, 2
        %v1373 = vadd.f32 %v1371, %v1372
        %v1374 = vrot.slane %v1373, 1
        %v1375 = vadd.f32 %v1373, %v1374
        %v1376 = vadd.f32 %v1333, %v1336
        %v1377 = vadd.f32 %v1376, %v1339
        %v1378 = vadd.f32 %v1377, %v1342
        %v1379 = vrot.slane %v1378, 4
        %v1380 = vadd.f32 %v1378, %v1379
        %v1381 = vrot.slane %v1380, 2
        %v1382 = vadd.f32 %v1380, %v1381
        %v1383 = vrot.slane %v1382, 1
        %v1384 = vadd.f32 %v1382, %v1383
        %v1385 = vadd.f32 %v1345, %v1348
        %v1386 = vadd.f32 %v1385, %v1351
        %v1387 = vadd.f32 %v1386, %v1354
        %v1388 = vrot.slane %v1387, 4
        %v1389 = vadd.f32 %v1387, %v1388
        %v1390 = vrot.slane %v1389, 2
        %v1391 = vadd.f32 %v1389, %v1390
        %v1392 = vrot.slane %v1391, 1
        %v1393 = vadd.f32 %v1391, %v1392
        %v1394 = vadd.f32 %v1357, %v1360
        %v1395 = vadd.f32 %v1394, %v1363
        %v1396 = vadd.f32 %v1395, %v1366
        %v1397 = vrot.slane %v1396, 4
        %v1398 = vadd.f32 %v1396, %v1397
        %v1399 = vrot.slane %v1398, 2
        %v1400 = vadd.f32 %v1398, %v1399
        %v1401 = vrot.slane %v1400, 1
        %v1402 = vadd.f32 %v1400, %v1401
        %v1403 = vmul.f32 %v1375, 0.0009765625
        %v1404 = vmul.f32 %v1384, 0.0009765625
        %v1405 = vmul.f32 %v1393, 0.0009765625
        %v1406 = vmul.f32 %v1402, 0.0009765625
        %v1407 = vmul.f32 %v1299, %v1299
        %v1408 = vmul.f32 %v1300, %v1300
        %v1409 = vmul.f32 %v1301, %v1301
        %v1410 = vmul.f32 %v1302, %v1302
        %v1411 = vsub.f32 %v1403, %v1407
        %v1412 = vsub.f32 %v1404, %v1408
        %v1413 = vsub.f32 %v1405, %v1409
        %v1414 = vsub.f32 %v1406, %v1410
        %v1415 = vsub.f32 %v1199, %v1299
        %v1416 = vsub.f32 %v1200, %v1299
        %v1417 = vsub.f32 %v1201, %v1299
        %v1418 = vsub.f32 %v1202, %v1299
        %v1419 = vsub.f32 %v1203, %v1300
        %v1420 = vsub.f32 %v1204, %v1300
        %v1421 = vsub.f32 %v1205, %v1300
        %v1422 = vsub.f32 %v1206, %v1300
        %v1423 = vsub.f32 %v1207, %v1301
        %v1424 = vsub.f32 %v1208, %v1301
        %v1425 = vsub.f32 %v1209, %v1301
        %v1426 = vsub.f32 %v1210, %v1301
        %v1427 = vsub.f32 %v1211, %v1302
        %v1428 = vsub.f32 %v1212, %v1302
        %v1429 = vsub.f32 %v1213, %v1302
        %v1430 = vsub.f32 %v1214, %v1302
        %v1431 = vadd.f32 %v1411, 1e-05
        %v1432 = vadd.f32 %v1412, 1e-05
        %v1433 = vadd.f32 %v1413, 1e-05
        %v1434 = vadd.f32 %v1414, 1e-05
        %v1435 = vrsqrt.pop %v1431
        %v1436 = vrsqrt.pop %v1432
        %v1437 = vrsqrt.pop %v1433
        %v1438 = vrsqrt.pop %v1434
        %v1439 = vmul.f32 %v1415, %v1435
        %v1440 = vmul.f32 %v1416, %v1435
        %v1441 = vmul.f32 %v1417, %v1435
        %v1442 = vmul.f32 %v1418, %v1435
        %v1443 = vmul.f32 %v1419, %v1436
        %v1444 = vmul.f32 %v1420, %v1436
        %v1445 = vmul.f32 %v1421, %v1436
        %v1446 = vmul.f32 %v1422, %v1436
        %v1447 = vmul.f32 %v1423, %v1437
        %v1448 = vmul.f32 %v1424, %v1437
        %v1449 = vmul.f32 %v1425, %v1437
        %v1450 = vmul.f32 %v1426, %v1437
        %v1451 = vmul.f32 %v1427, %v1438
        %v1452 = vmul.f32 %v1428, %v1438
        %v1453 = vmul.f32 %v1429, %v1438
        %v1454 = vmul.f32 %v1430, %v1438
        %v1455 = vsel %vm306, %v1439, -inf
        %1456 = vmax.xlane.f32.xlu0 %v1455
        %v1457 = vpop.xlane.xlu0 %1456
        %v1458 = vsel %vm306, %v1440, -inf
        %1459 = vmax.xlane.f32.xlu0 %v1458
        %v1460 = vpop.xlane.xlu0 %1459
        %v1461 = vsel %vm306, %v1441, -inf
        %1462 = vmax.xlane.f32.xlu0 %v1461
        %v1463 = vpop.xlane.xlu0 %1462
        %v1464 = vsel %vm306, %v1442, -inf
        %1465 = vmax.xlane.f32.xlu0 %v1464
        %v1466 = vpop.xlane.xlu0 %1465
        %v1467 = vsel %vm306, %v1443, -inf
        %1468 = vmax.xlane.f32.xlu0 %v1467
        %v1469 = vpop.xlane.xlu0 %1468
        %v1470 = vsel %vm306, %v1444, -inf
        %1471 = vmax.xlane.f32.xlu0 %v1470
        %v1472 = vpop.xlane.xlu0 %1471
        %v1473 = vsel %vm306, %v1445, -inf
        %1474 = vmax.xlane.f32.xlu0 %v1473
        %v1475 = vpop.xlane.xlu0 %1474
        %v1476 = vsel %vm306, %v1446, -inf
        %1477 = vmax.xlane.f32.xlu0 %v1476
        %v1478 = vpop.xlane.xlu0 %1477
        %v1479 = vsel %vm306, %v1447, -inf
        %1480 = vmax.xlane.f32.xlu0 %v1479
        %v1481 = vpop.xlane.xlu0 %1480
        %v1482 = vsel %vm306, %v1448, -inf
        %1483 = vmax.xlane.f32.xlu0 %v1482
        %v1484 = vpop.xlane.xlu0 %1483
        %v1485 = vsel %vm306, %v1449, -inf
        %1486 = vmax.xlane.f32.xlu0 %v1485
        %v1487 = vpop.xlane.xlu0 %1486
        %v1488 = vsel %vm306, %v1450, -inf
        %1489 = vmax.xlane.f32.xlu0 %v1488
        %v1490 = vpop.xlane.xlu0 %1489
        %v1491 = vsel %vm306, %v1451, -inf
        %1492 = vmax.xlane.f32.xlu0 %v1491
        %v1493 = vpop.xlane.xlu0 %1492
        %v1494 = vsel %vm306, %v1452, -inf
        %1495 = vmax.xlane.f32.xlu0 %v1494
        %v1496 = vpop.xlane.xlu0 %1495
        %v1497 = vsel %vm306, %v1453, -inf
        %1498 = vmax.xlane.f32.xlu0 %v1497
        %v1499 = vpop.xlane.xlu0 %1498
        %v1500 = vsel %vm306, %v1454, -inf
        %1501 = vmax.xlane.f32.xlu0 %v1500
        %v1502 = vpop.xlane.xlu0 %1501
        %v1503 = vsub.f32 %v1439, %v1457
        %v1504 = vsub.f32 %v1440, %v1460
        %v1505 = vsub.f32 %v1441, %v1463
        %v1506 = vsub.f32 %v1442, %v1466
        %v1507 = vsub.f32 %v1443, %v1469
        %v1508 = vsub.f32 %v1444, %v1472
        %v1509 = vsub.f32 %v1445, %v1475
        %v1510 = vsub.f32 %v1446, %v1478
        %v1511 = vsub.f32 %v1447, %v1481
        %v1512 = vsub.f32 %v1448, %v1484
        %v1513 = vsub.f32 %v1449, %v1487
        %v1514 = vsub.f32 %v1450, %v1490
        %v1515 = vsub.f32 %v1451, %v1493
        %v1516 = vsub.f32 %v1452, %v1496
        %v1517 = vsub.f32 %v1453, %v1499
        %v1518 = vsub.f32 %v1454, %v1502
        %v1519 = vmul.f32 %v1503, 1.442695
        %v1520 = vpow.pop %v1519
        %v1521 = vmul.f32 %v1504, 1.442695
        %v1522 = vpow.pop %v1521
        %v1523 = vmul.f32 %v1505, 1.442695
        %v1524 = vpow.pop %v1523
        %v1525 = vmul.f32 %v1506, 1.442695
        %v1526 = vpow.pop %v1525
        %v1527 = vmul.f32 %v1507, 1.442695
        %v1528 = vpow.pop %v1527
        %v1529 = vmul.f32 %v1508, 1.442695
        %v1530 = vpow.pop %v1529
        %v1531 = vmul.f32 %v1509, 1.442695
        %v1532 = vpow.pop %v1531
        %v1533 = vmul.f32 %v1510, 1.442695
        %v1534 = vpow.pop %v1533
        %v1535 = vmul.f32 %v1511, 1.442695
        %v1536 = vpow.pop %v1535
        %v1537 = vmul.f32 %v1512, 1.442695
        %v1538 = vpow.pop %v1537
        %v1539 = vmul.f32 %v1513, 1.442695
        %v1540 = vpow.pop %v1539
        %v1541 = vmul.f32 %v1514, 1.442695
        %v1542 = vpow.pop %v1541
        %v1543 = vmul.f32 %v1515, 1.442695
        %v1544 = vpow.pop %v1543
        %v1545 = vmul.f32 %v1516, 1.442695
        %v1546 = vpow.pop %v1545
        %v1547 = vmul.f32 %v1517, 1.442695
        %v1548 = vpow.pop %v1547
        %v1549 = vmul.f32 %v1518, 1.442695
        %v1550 = vpow.pop %v1549
        %v1551 = vsel %vm306, %v1520, 0.0
        %1552 = vadd.xlane.f32.xlu0 %v1551
        %v1553 = vpop.xlane.xlu0 %1552
        %v1554 = vsel %vm306, %v1522, 0.0
        %1555 = vadd.xlane.f32.xlu0 %v1554
        %v1556 = vpop.xlane.xlu0 %1555
        %v1557 = vsel %vm306, %v1524, 0.0
        %1558 = vadd.xlane.f32.xlu0 %v1557
        %v1559 = vpop.xlane.xlu0 %1558
        %v1560 = vsel %vm306, %v1526, 0.0
        %1561 = vadd.xlane.f32.xlu0 %v1560
        %v1562 = vpop.xlane.xlu0 %1561
        %v1563 = vsel %vm306, %v1528, 0.0
        %1564 = vadd.xlane.f32.xlu0 %v1563
        %v1565 = vpop.xlane.xlu0 %1564
        %v1566 = vsel %vm306, %v1530, 0.0
        %1567 = vadd.xlane.f32.xlu0 %v1566
        %v1568 = vpop.xlane.xlu0 %1567
        %v1569 = vsel %vm306, %v1532, 0.0
        %1570 = vadd.xlane.f32.xlu0 %v1569
        %v1571 = vpop.xlane.xlu0 %1570
        %v1572 = vsel %vm306, %v1534, 0.0
        %1573 = vadd.xlane.f32.xlu0 %v1572
        %v1574 = vpop.xlane.xlu0 %1573
        %v1575 = vsel %vm306, %v1536, 0.0
        %1576 = vadd.xlane.f32.xlu0 %v1575
        %v1577 = vpop.xlane.xlu0 %1576
        %v1578 = vsel %vm306, %v1538, 0.0
        %1579 = vadd.xlane.f32.xlu0 %v1578
        %v1580 = vpop.xlane.xlu0 %1579
        %v1581 = vsel %vm306, %v1540, 0.0
        %1582 = vadd.xlane.f32.xlu0 %v1581
        %v1583 = vpop.xlane.xlu0 %1582
        %v1584 = vsel %vm306, %v1542, 0.0
        %1585 = vadd.xlane.f32.xlu0 %v1584
        %v1586 = vpop.xlane.xlu0 %1585
        %v1587 = vsel %vm306, %v1544, 0.0
        %1588 = vadd.xlane.f32.xlu0 %v1587
        %v1589 = vpop.xlane.xlu0 %1588
        %v1590 = vsel %vm306, %v1546, 0.0
        %1591 = vadd.xlane.f32.xlu0 %v1590
        %v1592 = vpop.xlane.xlu0 %1591
        %v1593 = vsel %vm306, %v1548, 0.0
        %1594 = vadd.xlane.f32.xlu0 %v1593
        %v1595 = vpop.xlane.xlu0 %1594
        %v1596 = vsel %vm306, %v1550, 0.0
        %1597 = vadd.xlane.f32.xlu0 %v1596
        %v1598 = vpop.xlane.xlu0 %1597
        %v1599 = vrcp.pop %v1553
        %v1600 = vrcp.pop %v1556
        %v1601 = vrcp.pop %v1559
        %v1602 = vrcp.pop %v1562
        %v1603 = vrcp.pop %v1565
        %v1604 = vrcp.pop %v1568
        %v1605 = vrcp.pop %v1571
        %v1606 = vrcp.pop %v1574
        %v1607 = vrcp.pop %v1577
        %v1608 = vrcp.pop %v1580
        %v1609 = vrcp.pop %v1583
        %v1610 = vrcp.pop %v1586
        %v1611 = vrcp.pop %v1589
        %v1612 = vrcp.pop %v1592
        %v1613 = vrcp.pop %v1595
        %v1614 = vrcp.pop %v1598
        %v1615 = vmul.f32 %v1520, %v1599
        %v1616 = vmul.f32 %v1522, %v1600
        %v1617 = vmul.f32 %v1524, %v1601
        %v1618 = vmul.f32 %v1526, %v1602
        %v1619 = vmul.f32 %v1528, %v1603
        %v1620 = vmul.f32 %v1530, %v1604
        %v1621 = vmul.f32 %v1532, %v1605
        %v1622 = vmul.f32 %v1534, %v1606
        %v1623 = vmul.f32 %v1536, %v1607
        %v1624 = vmul.f32 %v1538, %v1608
        %v1625 = vmul.f32 %v1540, %v1609
        %v1626 = vmul.f32 %v1542, %v1610
        %v1627 = vmul.f32 %v1544, %v1611
        %v1628 = vmul.f32 %v1546, %v1612
        %v1629 = vmul.f32 %v1548, %v1613
        %v1630 = vmul.f32 %v1550, %v1614
        %v1631 = vsel %vm306, %v1615, 0.0
        %v1632 = vsel %vm306, %v1619, 0.0
        %v1633 = vadd.f32 %v1631, %v1632
        %v1634 = vsel %vm306, %v1623, 0.0
        %v1635 = vadd.f32 %v1633, %v1634
        %v1636 = vsel %vm306, %v1627, 0.0
        %v1637 = vadd.f32 %v1635, %v1636
        %v1638 = vsel %vm306, %v1616, 0.0
        %v1639 = vsel %vm306, %v1620, 0.0
        %v1640 = vadd.f32 %v1638, %v1639
        %v1641 = vsel %vm306, %v1624, 0.0
        %v1642 = vadd.f32 %v1640, %v1641
        %v1643 = vsel %vm306, %v1628, 0.0
        %v1644 = vadd.f32 %v1642, %v1643
        %v1645 = vsel %vm306, %v1617, 0.0
        %v1646 = vsel %vm306, %v1621, 0.0
        %v1647 = vadd.f32 %v1645, %v1646
        %v1648 = vsel %vm306, %v1625, 0.0
        %v1649 = vadd.f32 %v1647, %v1648
        %v1650 = vsel %vm306, %v1629, 0.0
        %v1651 = vadd.f32 %v1649, %v1650
        %v1652 = vsel %vm306, %v1618, 0.0
        %v1653 = vsel %vm306, %v1622, 0.0
        %v1654 = vadd.f32 %v1652, %v1653
        %v1655 = vsel %vm306, %v1626, 0.0
        %v1656 = vadd.f32 %v1654, %v1655
        %v1657 = vsel %vm306, %v1630, 0.0
        %v1658 = vadd.f32 %v1656, %v1657
        %v1659 = vrcp.pop 4.0
        %v1660 = vmul.f32 %v1637, %v1659
        %v1661 = vmul.f32 %v1644, %v1659
        %v1662 = vmul.f32 %v1651, %v1659
        %v1663 = vmul.f32 %v1658, %v1659
        %1664 = vst.msk [vmem:[%s255] sm:$0xff] %vm306, %v1660
        %1665 = vst.msk [vmem:[%s255 + $0x8] sm:$0xff] %vm306, %v1661
        %1666 = vst.msk [vmem:[%s255 + $0x10] sm:$0xff] %vm306, %v1662
        %1667 = vst.msk [vmem:[%s255 + $0x18] sm:$0xff] %vm306, %v1663
        %v1669 = vsel %vm306, %v1615, 0
        %v1672 = vsel %vm306, %v1616, 0
        %v1675 = vsel %vm306, %v1617, 0
        %v1678 = vsel %vm306, %v1618, 0
        %1680 = vmatprep.subr.mxu0 0.0
        %1681 = vmatpush1.msra.mxu0 %v684
        %1682 = vmatprep.subr.mxu0 0.0
        %1683 = vmatpush1.msra.mxu0 %v689
        %1684 = vmatprep.subr.mxu0 0.0
        %1685 = vmatpush1.msra.mxu0 %v694
        %1686 = vmatprep.subr.mxu0 0.0
        %1687 = vmatpush1.msra.mxu0 %v699
        %1688 = vmatprep.subr.mxu0 0.0
        %1689 = vmatpush1.msra.mxu0 0.0
        %1690 = vmatprep.subr.mxu0 0.0
        %1691 = vmatpush1.msra.mxu0 0.0
        %1692 = vmatprep.subr.mxu0 0.0
        %1693 = vmatpush1.msra.mxu0 0.0
        %1694 = vmatprep.subr.mxu0 0.0
        %1695 = vmatpush1.msra.mxu0 0.0
        %1696 = vmatprep.subr.mxu0 0.0
        %1697 = vmatpush1.msra.mxu0 0.0
        %1698 = vmatprep.subr.mxu0 0.0
        %1699 = vmatpush1.msra.mxu0 0.0
        %1700 = vmatprep.subr.mxu0 0.0
        %1701 = vmatpush1.msra.mxu0 0.0
        %1702 = vmatprep.subr.mxu0 0.0
        %1703 = vmatpush1.msra.mxu0 0.0
        %1704 = vmatprep.subr.mxu0 0.0
        %1705 = vmatpush1.msra.mxu0 0.0
        %1706 = vmatprep.subr.mxu0 0.0
        %1707 = vmatpush1.msra.mxu0 0.0
        %1708 = vmatprep.subr.mxu0 0.0
        %1709 = vmatpush1.msra.mxu0 0.0
        %1710 = vmatprep.subr.mxu0 0.0
        %1711 = vmatpush1.msra.mxu0 0.0
        %1712 = vmatprep.subr.mxu0 0.0
        %1713 = vmatpush1.msra.mxu0 0.0
        %1714 = vmatprep.subr.mxu0 0.0
        %1715 = vmatpush1.msra.mxu0 0.0
        %1716 = vmatprep.subr.mxu0 0.0
        %1717 = vmatpush1.msra.mxu0 0.0
        %1718 = vmatprep.subr.mxu0 0.0
        %1719 = vmatpush1.msra.mxu0 0.0
        %1720 = vmatprep.subr.mxu0 0.0
        %1721 = vmatpush1.msra.mxu0 0.0
        %1722 = vmatprep.subr.mxu0 0.0
        %1723 = vmatpush1.msra.mxu0 0.0
        %1724 = vmatprep.subr.mxu0 0.0
        %1725 = vmatpush1.msra.mxu0 0.0
        %1726 = vmatprep.subr.mxu0 0.0
        %1727 = vmatpush1.msra.mxu0 0.0
        %1728 = vmatprep.subr.mxu0 0.0
        %1729 = vmatpush1.msra.mxu0 0.0
        %1730 = vmatprep.subr.mxu0 0.0
        %1731 = vmatpush1.msra.mxu0 0.0
        %1732 = vmatprep.subr.mxu0 0.0
        %1733 = vmatpush1.msra.mxu0 0.0
        %1734 = vmatprep.subr.mxu0 0.0
        %1735 = vmatpush1.msra.mxu0 0.0
        %1736 = vmatprep.subr.mxu0 0.0
        %1737 = vmatpush1.msra.mxu0 0.0
        %1738 = vmatprep.subr.mxu0 0.0
        %1739 = vmatpush1.msra.mxu0 0.0
        %1740 = vmatprep.subr.mxu0 0.0
        %1741 = vmatpush1.msra.mxu0 0.0
        %1742 = vmatprep.subr.mxu0 0.0
        %1743 = vmatpush1.msra.mxu0 0.0
        %1744 = vmatprep.mubr.f32.mxu0 0.0
        %1745 = vmatmul.mubr.f32.gmra.mrb[0].mxu0 %v1669
        %v1746 = vpop.f32.mrb[0].mxu0
        %v1747 = vadd.f32 0.0, %v1746
        %v1748 = vpop.f32.mrb[0].mxu0
        %1749 = vmatprep.mubr.f32.mxu0 0.0
        %1750 = vmatmul.mubr.f32.gmra.mrb[0].mxu0 %v1672
        %v1751 = vpop.f32.mrb[0].mxu0
        %v1752 = vadd.f32 0.0, %v1751
        %v1753 = vpop.f32.mrb[0].mxu0
        %1754 = vmatprep.mubr.f32.mxu0 0.0
        %1755 = vmatmul.mubr.f32.gmra.mrb[0].mxu0 %v1675
        %v1756 = vpop.f32.mrb[0].mxu0
        %v1757 = vadd.f32 0.0, %v1756
        %v1758 = vpop.f32.mrb[0].mxu0
        %1759 = vmatprep.mubr.f32.mxu0 0.0
        %1760 = vmatmul.mubr.f32.gmra.mrb[0].mxu0 %v1678
        %v1761 = vpop.f32.mrb[0].mxu0
        %v1762 = vadd.f32 0.0, %v1761
        %v1763 = vpop.f32.mrb[0].mxu0
        %1764 = vdwg.mxu0
        %v1766 = vsel %vm306, %v1619, 0
        %v1769 = vsel %vm306, %v1620, 0
        %v1772 = vsel %vm306, %v1621, 0
        %v1775 = vsel %vm306, %v1622, 0
        %1777 = vmatprep.subr.mxu0 0.0
        %1778 = vmatpush1.msra.mxu0 %v704
        %1779 = vmatprep.subr.mxu0 0.0
        %1780 = vmatpush1.msra.mxu0 %v709
        %1781 = vmatprep.subr.mxu0 0.0
        %1782 = vmatpush1.msra.mxu0 %v714
        %1783 = vmatprep.subr.mxu0 0.0
        %1784 = vmatpush1.msra.mxu0 %v719
        %1785 = vmatprep.subr.mxu0 0.0
        %1786 = vmatpush1.msra.mxu0 0.0
        %1787 = vmatprep.subr.mxu0 0.0
        %1788 = vmatpush1.msra.mxu0 0.0
        %1789 = vmatprep.subr.mxu0 0.0
        %1790 = vmatpush1.msra.mxu0 0.0
        %1791 = vmatprep.subr.mxu0 0.0
        %1792 = vmatpush1.msra.mxu0 0.0
        %1793 = vmatprep.subr.mxu0 0.0
        %1794 = vmatpush1.msra.mxu0 0.0
        %1795 = vmatprep.subr.mxu0 0.0
        %1796 = vmatpush1.msra.mxu0 0.0
        %1797 = vmatprep.subr.mxu0 0.0
        %1798 = vmatpush1.msra.mxu0 0.0
        %1799 = vmatprep.subr.mxu0 0.0
        %1800 = vmatpush1.msra.mxu0 0.0
        %1801 = vmatprep.subr.mxu0 0.0
        %1802 = vmatpush1.msra.mxu0 0.0
        %1803 = vmatprep.subr.mxu0 0.0
        %1804 = vmatpush1.msra.mxu0 0.0
        %1805 = vmatprep.subr.mxu0 0.0
        %1806 = vmatpush1.msra.mxu0 0.0
        %1807 = vmatprep.subr.mxu0 0.0
        %1808 = vmatpush1.msra.mxu0 0.0
        %1809 = vmatprep.subr.mxu0 0.0
        %1810 = vmatpush1.msra.mxu0 0.0
        %1811 = vmatprep.subr.mxu0 0.0
        %1812 = vmatpush1.msra.mxu0 0.0
        %1813 = vmatprep.subr.mxu0 0.0
        %1814 = vmatpush1.msra.mxu0 0.0
        %1815 = vmatprep.subr.mxu0 0.0
        %1816 = vmatpush1.msra.mxu0 0.0
        %1817 = vmatprep.subr.mxu0 0.0
        %1818 = vmatpush1.msra.mxu0 0.0
        %1819 = vmatprep.subr.mxu0 0.0
        %1820 = vmatpush1.msra.mxu0 0.0
        %1821 = vmatprep.subr.mxu0 0.0
        %1822 = vmatpush1.msra.mxu0 0.0
        %1823 = vmatprep.subr.mxu0 0.0
        %1824 = vmatpush1.msra.mxu0 0.0
        %1825 = vmatprep.subr.mxu0 0.0
        %1826 = vmatpush1.msra.mxu0 0.0
        %1827 = vmatprep.subr.mxu0 0.0
        %1828 = vmatpush1.msra.mxu0 0.0
        %1829 = vmatprep.subr.mxu0 0.0
        %1830 = vmatpush1.msra.mxu0 0.0
        %1831 = vmatprep.subr.mxu0 0.0
        %1832 = vmatpush1.msra.mxu0 0.0
        %1833 = vmatprep.subr.mxu0 0.0
        %1834 = vmatpush1.msra.mxu0 0.0
        %1835 = vmatprep.subr.mxu0 0.0
        %1836 = vmatpush1.msra.mxu0 0.0
        %1837 = vmatprep.subr.mxu0 0.0
        %1838 = vmatpush1.msra.mxu0 0.0
        %1839 = vmatprep.subr.mxu0 0.0
        %1840 = vmatpush1.msra.mxu0 0.0
        %1841 = vmatprep.mubr.f32.mxu0 0.0
        %1842 = vmatmul.mubr.f32.gmra.mrb[0].mxu0 %v1766
        %v1843 = vpop.f32.mrb[0].mxu0
        %v1844 = vadd.f32 0.0, %v1843
        %v1845 = vpop.f32.mrb[0].mxu0
        %1846 = vmatprep.mubr.f32.mxu0 0.0
        %1847 = vmatmul.mubr.f32.gmra.mrb[0].mxu0 %v1769
        %v1848 = vpop.f32.mrb[0].mxu0
        %v1849 = vadd.f32 0.0, %v1848
        %v1850 = vpop.f32.mrb[0].mxu0
        %1851 = vmatprep.mubr.f32.mxu0 0.0
        %1852 = vmatmul.mubr.f32.gmra.mrb[0].mxu0 %v1772
        %v1853 = vpop.f32.mrb[0].mxu0
        %v1854 = vadd.f32 0.0, %v1853
        %v1855 = vpop.f32.mrb[0].mxu0
        %1856 = vmatprep.mubr.f32.mxu0 0.0
        %1857 = vmatmul.mubr.f32.gmra.mrb[0].mxu0 %v1775
        %v1858 = vpop.f32.mrb[0].mxu0
        %v1859 = vadd.f32 0.0, %v1858
        %v1860 = vpop.f32.mrb[0].mxu0
        %1861 = vdwg.mxu0
        %v1863 = vsel %vm306, %v1623, 0
        %v1866 = vsel %vm306, %v1624, 0
        %v1869 = vsel %vm306, %v1625, 0
        %v1872 = vsel %vm306, %v1626, 0
        %1874 = vmatprep.subr.mxu0 0.0
        %1875 = vmatpush1.msra.mxu0 %v724
        %1876 = vmatprep.subr.mxu0 0.0
        %1877 = vmatpush1.msra.mxu0 %v729
        %1878 = vmatprep.subr.mxu0 0.0
        %1879 = vmatpush1.msra.mxu0 %v734
        %1880 = vmatprep.subr.mxu0 0.0
        %1881 = vmatpush1.msra.mxu0 %v739
        %1882 = vmatprep.subr.mxu0 0.0
        %1883 = vmatpush1.msra.mxu0 0.0
        %1884 = vmatprep.subr.mxu0 0.0
        %1885 = vmatpush1.msra.mxu0 0.0
        %1886 = vmatprep.subr.mxu0 0.0
        %1887 = vmatpush1.msra.mxu0 0.0
        %1888 = vmatprep.subr.mxu0 0.0
        %1889 = vmatpush1.msra.mxu0 0.0
        %1890 = vmatprep.subr.mxu0 0.0
        %1891 = vmatpush1.msra.mxu0 0.0
        %1892 = vmatprep.subr.mxu0 0.0
        %1893 = vmatpush1.msra.mxu0 0.0
        %1894 = vmatprep.subr.mxu0 0.0
        %1895 = vmatpush1.msra.mxu0 0.0
        %1896 = vmatprep.subr.mxu0 0.0
        %1897 = vmatpush1.msra.mxu0 0.0
        %1898 = vmatprep.subr.mxu0 0.0
        %1899 = vmatpush1.msra.mxu0 0.0
        %1900 = vmatprep.subr.mxu0 0.0
        %1901 = vmatpush1.msra.mxu0 0.0
        %1902 = vmatprep.subr.mxu0 0.0
        %1903 = vmatpush1.msra.mxu0 0.0
        %1904 = vmatprep.subr.mxu0 0.0
        %1905 = vmatpush1.msra.mxu0 0.0
        %1906 = vmatprep.subr.mxu0 0.0
        %1907 = vmatpush1.msra.mxu0 0.0
        %1908 = vmatprep.subr.mxu0 0.0
        %1909 = vmatpush1.msra.mxu0 0.0
        %1910 = vmatprep.subr.mxu0 0.0
        %1911 = vmatpush1.msra.mxu0 0.0
        %1912 = vmatprep.subr.mxu0 0.0
        %1913 = vmatpush1.msra.mxu0 0.0
        %1914 = vmatprep.subr.mxu0 0.0
        %1915 = vmatpush1.msra.mxu0 0.0
        %1916 = vmatprep.subr.mxu0 0.0
        %1917 = vmatpush1.msra.mxu0 0.0
        %1918 = vmatprep.subr.mxu0 0.0
        %1919 = vmatpush1.msra.mxu0 0.0
        %1920 = vmatprep.subr.mxu0 0.0
        %1921 = vmatpush1.msra.mxu0 0.0
        %1922 = vmatprep.subr.mxu0 0.0
        %1923 = vmatpush1.msra.mxu0 0.0
        %1924 = vmatprep.subr.mxu0 0.0
        %1925 = vmatpush1.msra.mxu0 0.0
        %1926 = vmatprep.subr.mxu0 0.0
        %1927 = vmatpush1.msra.mxu0 0.0
        %1928 = vmatprep.subr.mxu0 0.0
        %1929 = vmatpush1.msra.mxu0 0.0
        %1930 = vmatprep.subr.mxu0 0.0
        %1931 = vmatpush1.msra.mxu0 0.0
        %1932 = vmatprep.subr.mxu0 0.0
        %1933 = vmatpush1.msra.mxu0 0.0
        %1934 = vmatprep.subr.mxu0 0.0
        %1935 = vmatpush1.msra.mxu0 0.0
        %1936 = vmatprep.subr.mxu0 0.0
        %1937 = vmatpush1.msra.mxu0 0.0
        %1938 = vmatprep.mubr.f32.mxu0 0.0
        %1939 = vmatmul.mubr.f32.gmra.mrb[0].mxu0 %v1863
        %v1940 = vpop.f32.mrb[0].mxu0
        %v1941 = vadd.f32 0.0, %v1940
        %v1942 = vpop.f32.mrb[0].mxu0
        %1943 = vmatprep.mubr.f32.mxu0 0.0
        %1944 = vmatmul.mubr.f32.gmra.mrb[0].mxu0 %v1866
        %v1945 = vpop.f32.mrb[0].mxu0
        %v1946 = vadd.f32 0.0, %v1945
        %v1947 = vpop.f32.mrb[0].mxu0
        %1948 = vmatprep.mubr.f32.mxu0 0.0
        %1949 = vmatmul.mubr.f32.gmra.mrb[0].mxu0 %v1869
        %v1950 = vpop.f32.mrb[0].mxu0
        %v1951 = vadd.f32 0.0, %v1950
        %v1952 = vpop.f32.mrb[0].mxu0
        %1953 = vmatprep.mubr.f32.mxu0 0.0
        %1954 = vmatmul.mubr.f32.gmra.mrb[0].mxu0 %v1872
        %v1955 = vpop.f32.mrb[0].mxu0
        %v1956 = vadd.f32 0.0, %v1955
        %v1957 = vpop.f32.mrb[0].mxu0
        %1958 = vdwg.mxu0
        %v1960 = vsel %vm306, %v1627, 0
        %v1963 = vsel %vm306, %v1628, 0
        %v1966 = vsel %vm306, %v1629, 0
        %v1969 = vsel %vm306, %v1630, 0
        %1971 = vmatprep.subr.mxu0 0.0
        %1972 = vmatpush1.msra.mxu0 %v744
        %1973 = vmatprep.subr.mxu0 0.0
        %1974 = vmatpush1.msra.mxu0 %v749
        %1975 = vmatprep.subr.mxu0 0.0
        %1976 = vmatpush1.msra.mxu0 %v754
        %1977 = vmatprep.subr.mxu0 0.0
        %1978 = vmatpush1.msra.mxu0 %v759
        %1979 = vmatprep.subr.mxu0 0.0
        %1980 = vmatpush1.msra.mxu0 0.0
        %1981 = vmatprep.subr.mxu0 0.0
        %1982 = vmatpush1.msra.mxu0 0.0
        %1983 = vmatprep.subr.mxu0 0.0
        %1984 = vmatpush1.msra.mxu0 0.0
        %1985 = vmatprep.subr.mxu0 0.0
        %1986 = vmatpush1.msra.mxu0 0.0
        %1987 = vmatprep.subr.mxu0 0.0
        %1988 = vmatpush1.msra.mxu0 0.0
        %1989 = vmatprep.subr.mxu0 0.0
        %1990 = vmatpush1.msra.mxu0 0.0
        %1991 = vmatprep.subr.mxu0 0.0
        %1992 = vmatpush1.msra.mxu0 0.0
        %1993 = vmatprep.subr.mxu0 0.0
        %1994 = vmatpush1.msra.mxu0 0.0
        %1995 = vmatprep.subr.mxu0 0.0
        %1996 = vmatpush1.msra.mxu0 0.0
        %1997 = vmatprep.subr.mxu0 0.0
        %1998 = vmatpush1.msra.mxu0 0.0
        %1999 = vmatprep.subr.mxu0 0.0
        %2000 = vmatpush1.msra.mxu0 0.0
        %2001 = vmatprep.subr.mxu0 0.0
        %2002 = vmatpush1.msra.mxu0 0.0
        %2003 = vmatprep.subr.mxu0 0.0
        %2004 = vmatpush1.msra.mxu0 0.0
        %2005 = vmatprep.subr.mxu0 0.0
        %2006 = vmatpush1.msra.mxu0 0.0
        %2007 = vmatprep.subr.mxu0 0.0
        %2008 = vmatpush1.msra.mxu0 0.0
        %2009 = vmatprep.subr.mxu0 0.0
        %2010 = vmatpush1.msra.mxu0 0.0
        %2011 = vmatprep.subr.mxu0 0.0
        %2012 = vmatpush1.msra.mxu0 0.0
        %2013 = vmatprep.subr.mxu0 0.0
        %2014 = vmatpush1.msra.mxu0 0.0
        %2015 = vmatprep.subr.mxu0 0.0
        %2016 = vmatpush1.msra.mxu0 0.0
        %2017 = vmatprep.subr.mxu0 0.0
        %2018 = vmatpush1.msra.mxu0 0.0
        %2019 = vmatprep.subr.mxu0 0.0
        %2020 = vmatpush1.msra.mxu0 0.0
        %2021 = vmatprep.subr.mxu0 0.0
        %2022 = vmatpush1.msra.mxu0 0.0
        %2023 = vmatprep.subr.mxu0 0.0
        %2024 = vmatpush1.msra.mxu0 0.0
        %2025 = vmatprep.subr.mxu0 0.0
        %2026 = vmatpush1.msra.mxu0 0.0
        %2027 = vmatprep.subr.mxu0 0.0
        %2028 = vmatpush1.msra.mxu0 0.0
        %2029 = vmatprep.subr.mxu0 0.0
        %2030 = vmatpush1.msra.mxu0 0.0
        %2031 = vmatprep.subr.mxu0 0.0
        %2032 = vmatpush1.msra.mxu0 0.0
        %2033 = vmatprep.subr.mxu0 0.0
        %2034 = vmatpush1.msra.mxu0 0.0
        %2035 = vmatprep.mubr.f32.mxu0 0.0
        %2036 = vmatmul.mubr.f32.gmra.mrb[0].mxu0 %v1960
        %v2037 = vpop.f32.mrb[0].mxu0
        %v2038 = vadd.f32 0.0, %v2037
        %v2039 = vpop.f32.mrb[0].mxu0
        %2040 = vmatprep.mubr.f32.mxu0 0.0
        %2041 = vmatmul.mubr.f32.gmra.mrb[0].mxu0 %v1963
        %v2042 = vpop.f32.mrb[0].mxu0
        %v2043 = vadd.f32 0.0, %v2042
        %v2044 = vpop.f32.mrb[0].mxu0
        %2045 = vmatprep.mubr.f32.mxu0 0.0
        %2046 = vmatmul.mubr.f32.gmra.mrb[0].mxu0 %v1966
        %v2047 = vpop.f32.mrb[0].mxu0
        %v2048 = vadd.f32 0.0, %v2047
        %v2049 = vpop.f32.mrb[0].mxu0
        %2050 = vmatprep.mubr.f32.mxu0 0.0
        %2051 = vmatmul.mubr.f32.gmra.mrb[0].mxu0 %v1969
        %v2052 = vpop.f32.mrb[0].mxu0
        %v2053 = vadd.f32 0.0, %v2052
        %v2054 = vpop.f32.mrb[0].mxu0
        %2055 = vdwg.mxu0
        %v2056 = vsel %vm762, %v1747, 0.0
        %v2057 = vsel %vm762, %v1844, 0.0
        %v2058 = vadd.f32 %v2056, %v2057
        %v2059 = vsel %vm762, %v1941, 0.0
        %v2060 = vadd.f32 %v2058, %v2059
        %v2061 = vsel %vm762, %v2038, 0.0
        %v2062 = vadd.f32 %v2060, %v2061
        %v2063 = vsel %vm762, %v1752, 0.0
        %v2064 = vsel %vm762, %v1849, 0.0
        %v2065 = vadd.f32 %v2063, %v2064
        %v2066 = vsel %vm762, %v1946, 0.0
        %v2067 = vadd.f32 %v2065, %v2066
        %v2068 = vsel %vm762, %v2043, 0.0
        %v2069 = vadd.f32 %v2067, %v2068
        %v2070 = vsel %vm762, %v1757, 0.0
        %v2071 = vsel %vm762, %v1854, 0.0
        %v2072 = vadd.f32 %v2070, %v2071
        %v2073 = vsel %vm762, %v1951, 0.0
        %v2074 = vadd.f32 %v2072, %v2073
        %v2075 = vsel %vm762, %v2048, 0.0
        %v2076 = vadd.f32 %v2074, %v2075
        %v2077 = vsel %vm762, %v1762, 0.0
        %v2078 = vsel %vm762, %v1859, 0.0
        %v2079 = vadd.f32 %v2077, %v2078
        %v2080 = vsel %vm762, %v1956, 0.0
        %v2081 = vadd.f32 %v2079, %v2080
        %v2082 = vsel %vm762, %v2053, 0.0
        %v2083 = vadd.f32 %v2081, %v2082
        %v2084 = vmul.f32 %v2062, %v1659
        %v2085 = vmul.f32 %v2069, %v1659
        %v2086 = vmul.f32 %v2076, %v1659
        %v2087 = vmul.f32 %v2083, %v1659
        %2088 = vxpose.xlu0.b32.start [1/16] %v2084, 128
        %2089 = vxpose.xlu0.b32.cont [2/16] %v2085, 128
        %2090 = vxpose.xlu0.b32.cont [3/16] %v2086, 128
        %2091 = vxpose.xlu0.b32.cont [4/16] %v2087, 128
        %2092 = vxpose.xlu0.b32.cont [5/16] 0.0, 128
        %2093 = vxpose.xlu0.b32.cont [6/16] 0.0, 128
        %2094 = vxpose.xlu0.b32.cont [7/16] 0.0, 128
        %2095 = vxpose.xlu0.b32.cont [8/16] 0.0, 128
        %2096 = vxpose.xlu0.b32.cont [9/16] 0.0, 128
        %2097 = vxpose.xlu0.b32.cont [10/16] 0.0, 128
        %2098 = vxpose.xlu0.b32.cont [11/16] 0.0, 128
        %2099 = vxpose.xlu0.b32.cont [12/16] 0.0, 128
        %2100 = vxpose.xlu0.b32.cont [13/16] 0.0, 128
        %2101 = vxpose.xlu0.b32.cont [14/16] 0.0, 128
        %2102 = vxpose.xlu0.b32.cont [15/16] 0.0, 128
        %2103 = vxpose.xlu0.b32.end [16/16] 0.0, 128
        %v2104 = vpop.trf.xlu0
        %v2105 = vpop.trf.xlu0
        %v2106 = vpop.trf.xlu0
        %v2107 = vpop.trf.xlu0
        %v2108 = vpop.trf.xlu0
        %v2109 = vpop.trf.xlu0
        %v2110 = vpop.trf.xlu0
        %v2111 = vpop.trf.xlu0
        %v2112 = vpop.trf.xlu0
        %v2113 = vpop.trf.xlu0
        %v2114 = vpop.trf.xlu0
        %v2115 = vpop.trf.xlu0
        %v2116 = vpop.trf.xlu0
        %v2117 = vpop.trf.xlu0
        %v2118 = vpop.trf.xlu0
        %v2119 = vpop.trf.xlu0
        %v2120 = vld [vmem:[#allocation7] sm:$0xff]
        %v2121 = vld [vmem:[#allocation7 + $0x8] sm:$0xff]
        %v2122 = vld [vmem:[#allocation7 + $0x10] sm:$0xff]
        %v2123 = vld [vmem:[#allocation7 + $0x18] sm:$0xff]
        %v2125 = vsel %vm306, %v2104, 0
        %v2128 = vsel %vm306, %v2105, 0
        %2130 = vmatprep.subr.mxu0 0.0
        %2131 = vmatpush1.msra.mxu0 %v2120
        %2132 = vmatprep.subr.mxu0 0.0
        %2133 = vmatpush1.msra.mxu0 %v2121
        %2134 = vmatprep.subr.mxu0 0.0
        %2135 = vmatpush1.msra.mxu0 %v2122
        %2136 = vmatprep.subr.mxu0 0.0
        %2137 = vmatpush1.msra.mxu0 %v2123
        %2138 = vmatprep.subr.mxu0 0.0
        %2139 = vmatpush1.msra.mxu0 0.0
        %2140 = vmatprep.subr.mxu0 0.0
        %2141 = vmatpush1.msra.mxu0 0.0
        %2142 = vmatprep.subr.mxu0 0.0
        %2143 = vmatpush1.msra.mxu0 0.0
        %2144 = vmatprep.subr.mxu0 0.0
        %2145 = vmatpush1.msra.mxu0 0.0
        %2146 = vmatprep.subr.mxu0 0.0
        %2147 = vmatpush1.msra.mxu0 0.0
        %2148 = vmatprep.subr.mxu0 0.0
        %2149 = vmatpush1.msra.mxu0 0.0
        %2150 = vmatprep.subr.mxu0 0.0
        %2151 = vmatpush1.msra.mxu0 0.0
        %2152 = vmatprep.subr.mxu0 0.0
        %2153 = vmatpush1.msra.mxu0 0.0
        %2154 = vmatprep.subr.mxu0 0.0
        %2155 = vmatpush1.msra.mxu0 0.0
        %2156 = vmatprep.subr.mxu0 0.0
        %2157 = vmatpush1.msra.mxu0 0.0
        %2158 = vmatprep.subr.mxu0 0.0
        %2159 = vmatpush1.msra.mxu0 0.0
        %2160 = vmatprep.subr.mxu0 0.0
        %2161 = vmatpush1.msra.mxu0 0.0
        %2162 = vmatprep.subr.mxu0 0.0
        %2163 = vmatpush1.msra.mxu0 0.0
        %2164 = vmatprep.subr.mxu0 0.0
        %2165 = vmatpush1.msra.mxu0 0.0
        %2166 = vmatprep.subr.mxu0 0.0
        %2167 = vmatpush1.msra.mxu0 0.0
        %2168 = vmatprep.subr.mxu0 0.0
        %2169 = vmatpush1.msra.mxu0 0.0
        %2170 = vmatprep.subr.mxu0 0.0
        %2171 = vmatpush1.msra.mxu0 0.0
        %2172 = vmatprep.subr.mxu0 0.0
        %2173 = vmatpush1.msra.mxu0 0.0
        %2174 = vmatprep.subr.mxu0 0.0
        %2175 = vmatpush1.msra.mxu0 0.0
        %2176 = vmatprep.subr.mxu0 0.0
        %2177 = vmatpush1.msra.mxu0 0.0
        %2178 = vmatprep.subr.mxu0 0.0
        %2179 = vmatpush1.msra.mxu0 0.0
        %2180 = vmatprep.subr.mxu0 0.0
        %2181 = vmatpush1.msra.mxu0 0.0
        %2182 = vmatprep.subr.mxu0 0.0
        %2183 = vmatpush1.msra.mxu0 0.0
        %2184 = vmatprep.subr.mxu0 0.0
        %2185 = vmatpush1.msra.mxu0 0.0
        %2186 = vmatprep.subr.mxu0 0.0
        %2187 = vmatpush1.msra.mxu0 0.0
        %2188 = vmatprep.subr.mxu0 0.0
        %2189 = vmatpush1.msra.mxu0 0.0
        %2190 = vmatprep.subr.mxu0 0.0
        %2191 = vmatpush1.msra.mxu0 0.0
        %2192 = vmatprep.subr.mxu0 0.0
        %2193 = vmatpush1.msra.mxu0 0.0
        %2194 = vmatprep.mubr.f32.mxu0 0.0
        %2195 = vmatmul.mubr.f32.gmra.mrb[0].mxu0 %v2125
        %v2196 = vpop.f32.mrb[0].mxu0
        %v2197 = vadd.f32 0.0, %v2196
        %v2198 = vpop.f32.mrb[0].mxu0
        %2199 = vmatprep.mubr.f32.mxu0 0.0
        %2200 = vmatmul.mubr.f32.gmra.mrb[0].mxu0 %v2128
        %v2201 = vpop.f32.mrb[0].mxu0
        %v2202 = vadd.f32 0.0, %v2201
        %v2203 = vpop.f32.mrb[0].mxu0
        %2204 = vdwg.mxu0
        %2205 = vst.msk [vmem:[%s248] sm:$0xff] %vm306, %v2197
        %2206 = vst.msk [vmem:[%s248 + $0x8] sm:$0xff] %vm306, %v2202
        %s2207 = sand.u32 %s102, 1
        %s2208 = scalar_lea.sflag [#allocation4], %s2207
        %s2209 = sand.u32 %s102, 1
        %s2210 = smul.addr %s2209, 16
        %s2211 = scalar_lea.vmem [#allocation8], %s2210
        %s2212 = sand.u32 %s128, 1
        %s2213 = scalar_lea.sflag [#allocation10], %s2212
        %s2214 = sand.u32 %s128, 1
        %s2215 = smul.addr %s2214, 32
        %s2216 = scalar_lea.vmem [#allocation9], %s2215
        // Predicated region
        $region45: #{tpu_custom_call.1} parent=31 // pred_check
          %p2217 = pneg %p112
        $region46: #{tpu_custom_call.1} parent=31 // pred_check_branch
          %2219 = sbr.rel (%p2217) target = $region48
        $region47: #{tpu_custom_call.1} parent=31 // pred_region
          %s2221 = ssub.s32 256, 256
          %2222 = vsyncadd %s2208, %s2221
          %s2223 = smul.addr %s26, 2
          %s2224 = smul.addr %s2223, 128
          %s2225 = scalar_lea.hbm %s3, %s2224
          %s2226 = sshll.u32 %s2211, 4
          %s2227 = int_to_ptr.vmem [resolvable:$true] %s2226
          %2232 = dma.vmem_to_hbm [thread:$0]  %s2227, 256, %s2225, %s2208, 128, 128, 8
        $region48: #{tpu_custom_call.1} parent=31 // pred_fallthru
          _
        // Predicated region
        $region49: #{tpu_custom_call.1} parent=31 // pred_check
          %p2233 = pneg %p138
        $region50: #{tpu_custom_call.1} parent=31 // pred_check_branch
          %2235 = sbr.rel (%p2233) target = $region52
        $region51: #{tpu_custom_call.1} parent=31 // pred_region
          %s2237 = ssub.s32 512, 512
          %2238 = vsyncadd %s2213, %s2237
          %s2239 = smul.addr %s26, 4
          %s2240 = smul.addr %s2239, 128
          %s2241 = scalar_lea.hbm %s4, %s2240
          %s2242 = sshll.u32 %s2216, 4
          %s2243 = int_to_ptr.vmem [resolvable:$true] %s2242
          %2248 = dma.vmem_to_hbm [thread:$0]  %s2243, 512, %s2241, %s2213, 128, 128, 8
        $region52: #{tpu_custom_call.1} parent=31 // pred_fallthru
          _
      $region32: #{tpu_custom_call.1} parent=5 // pred_fallthru
        _
      %p2249 = scmp.le.s32.totalorder 2, %s21
      // Predicated region
      $region53: #{tpu_custom_call.1} parent=5 // pred_check
        %p2250 = pneg %p2249
      $region54: #{tpu_custom_call.1} parent=5 // pred_check_branch
        %2252 = sbr.rel (%p2250) target = $region56
      $region55: #{tpu_custom_call.1} parent=5 // pred_region
        %s2253 = ssub.s32 %s21, 2
        // Predicated region
        $region57: #{tpu_custom_call.1} parent=55 // pred_check
          %p2254 = pneg %p118
        $region58: #{tpu_custom_call.1} parent=55 // pred_check_branch
          %2256 = sbr.rel (%p2254) target = $region60
        $region59: #{tpu_custom_call.1} parent=55 // pred_region
          %s2257 = sand.u32 %s103, 1
          %s2258 = scalar_lea.sflag [#allocation4], %s2257
          %s2259 = sand.u32 %s103, 1
          %s2260 = smul.addr %s2259, 16
          %s2261 = scalar_lea.vmem [#allocation8], %s2260
          %2262 = dma.done %s2258, 256
        $region60: #{tpu_custom_call.1} parent=55 // pred_fallthru
          _
        // Predicated region
        $region61: #{tpu_custom_call.1} parent=55 // pred_check
          %p2263 = pneg %p144
        $region62: #{tpu_custom_call.1} parent=55 // pred_check_branch
          %2265 = sbr.rel (%p2263) target = $region64
        $region63: #{tpu_custom_call.1} parent=55 // pred_region
          %s2266 = sand.u32 %s129, 1
          %s2267 = scalar_lea.sflag [#allocation10], %s2266
          %s2268 = sand.u32 %s129, 1
          %s2269 = smul.addr %s2268, 32
          %s2270 = scalar_lea.vmem [#allocation9], %s2269
          %2271 = dma.done %s2267, 512
        $region64: #{tpu_custom_call.1} parent=55 // pred_fallthru
          _
      $region56: #{tpu_custom_call.1} parent=5 // pred_fallthru
        _
    $region6: #{tpu_custom_call.1} parent=1 // loop_footer
      %s25 = sadd.s32 1, %s21
    $region7: #{tpu_custom_call.1} parent=1 // loop_footer_branch
      %20 = sbr.rel target = $region3
    $region8: #{tpu_custom_call.1} parent=1 // loop_exit
      _
    %2272 = vsyncpa [#allocation3], 1
    %s2273 = scalar_lea.sflag [#allocation3], 1
    %2274 = vsyncpa %s2273, 1
    %2275 = vsyncpa [#allocation6], 1
    %2276 = vsyncpa [#allocation4], 1
    %s2277 = scalar_lea.sflag [#allocation4], 1
    %2278 = vsyncpa %s2277, 1
    %2279 = vsyncpa [#allocation10], 1
    %s2280 = scalar_lea.sflag [#allocation10], 1
    %2281 = vsyncpa %s2280, 1

</llo_original>
